<compile_context>
chip_gen: v6e
topology: v6e:2x2x1
jax: 0.10.0
libtpu: 0.0.40
codegen_flags: <defaults>
</compile_context>

<pallas_src>
import jax
import jax.numpy as jnp
from jax import lax
from jax.experimental import pallas as pl
from jax.experimental.pallas import tpu as pltpu


# Model dims (match the PyTorch module).
D1, D2, D3, D4, D_OUT = 128, 256, 528, 128, 1
D3_PAD = 640            # 528 padded up to a lane-aligned multiple of 128
TILE_B_SINGLE = 256     # at or below this, one exact tile (block == full batch)
TILE_B_MAX = 512        # cap on the batch tile (~2.5 MiB f32 intermediates per tile)


def _sigmoid(x):
    # sigmoid(x) == 0.5 * (tanh(x/2) + 1): one EUP transcendental, no divide.
    return 0.5 * (jnp.tanh(0.5 * x) + 1.0)


def _leaky_relu(x, negative_slope=0.01):
    return jnp.where(x >= 0, x, negative_slope * x)


def mlp_kernel(x_ref,
               w1_ref, b1_ref,
               w2_ref, b2_ref,
               w3_ref, b3_ref,
               w4_ref, b4_ref,
               w5_ref, b5_ref,
               o_ref):
    """Forward for one batch tile. Weights bf16, activations & accumulation f32."""
    bf16 = jnp.bfloat16

    h = jnp.dot(x_ref[...].astype(bf16), w1_ref[...],
                preferred_element_type=jnp.float32) + b1_ref[...]
    h = _sigmoid(h)

    h = jnp.dot(h.astype(bf16), w2_ref[...],
                preferred_element_type=jnp.float32) + b2_ref[...]
    h = jnp.tanh(h)

    h = jnp.dot(h.astype(bf16), w3_ref[...],
                preferred_element_type=jnp.float32) + b3_ref[...]
    h = _sigmoid(h)  # padded lanes see 0 -> 0.5, cancelled exactly by zero rows of w4

    h = jnp.dot(h.astype(bf16), w4_ref[...],
                preferred_element_type=jnp.float32) + b4_ref[...]
    h = jnp.tanh(h)

    # Final 128 -> 1 projection, produced lane-dense as (1, tile_b):
    # contract the last axes of w5 [1, 128] and h [tile_b, 128] (trans-B matmul).
    y = lax.dot_general(w5_ref[...], h.astype(bf16),
                        dimension_numbers=(((1,), (1,)), ((), ())),
                        preferred_element_type=jnp.float32)
    y = y + b5_ref[...]                       # b5 is (1, 1): broadcasts over lanes
    o_ref[...] = _leaky_relu(y).astype(o_ref.dtype)


def _round_up(n, m):
    return ((n + m - 1) // m) * m


def _pick_tile_b(B):
    """Batch tile: exact single tile for small B; >=2 tiles (both v7x TCs) above 256."""
    if B <= TILE_B_SINGLE:
        return B                                    # block == full batch, no OOB reads
    half = -(-B // 2)                               # ceil(B / 2)
    return min(TILE_B_MAX, _round_up(half, 8))


@jax.jit
def net_forward(x, p):
    """Runs the fused MLP kernel. x: [B, input_size] f32, p: prepare_params(...) dict."""
    B, d_in = x.shape
    tile_b = _pick_tile_b(B)
    num_tiles = pl.cdiv(B, tile_b)

    const = lambda i: (0, 0)  # weights/biases: fetched once, VMEM-resident across tiles
    in_specs = [
        pl.BlockSpec((tile_b, d_in), lambda i: (i, 0)),        # x tile (pipelined)
        pl.BlockSpec((d_in, D1), const),   pl.BlockSpec((1, D1), const),
        pl.BlockSpec((D1, D2), const),     pl.BlockSpec((1, D2), const),
        pl.BlockSpec((D2, D3_PAD), const), pl.BlockSpec((1, D3_PAD), const),
        pl.BlockSpec((D3_PAD, D4), const), pl.BlockSpec((1, D4), const),
        pl.BlockSpec((1, D4), const),      pl.BlockSpec((1, D_OUT), const),
    ]
    # Lane-dense output: one (1, tile_b) row per batch tile.
    out_specs = pl.BlockSpec((1, tile_b), lambda i: (i, 0))

    # TODO(synk): constant-index weight blocks are still double-buffered; single-buffer
    #             them (pipeline_mode) and keep weights VMEM-resident across pallas_calls
    #             (P10 cross-call futures) for repeated tiny-batch inference.
    out = pl.pallas_call(
        mlp_kernel,
        out_shape=jax.ShapeDtypeStruct((num_tiles, tile_b), jnp.float32),
        grid=(num_tiles,),
        in_specs=in_specs,
        out_specs=out_specs,
        compiler_params=pltpu.CompilerParams(
            dimension_semantics=("parallel",),       # batch tiles split across v7x's 2 TCs
            vmem_limit_bytes=32 * 1024 * 1024,       # headroom above v5e's 16 MiB default
        ),
    )(x, p["w1"], p["b1"], p["w2"], p["b2"], p["w3"], p["b3"],
      p["w4"], p["b4"], p["w5"], p["b5"])

    # (num_tiles, tile_b) -> (B, 1); rows beyond B (garbage from the partial tile) dropped.
    return out.reshape(num_tiles * tile_b)[:B].reshape(B, 1)


def init_params(key, input_size):
    """PyTorch-style Linear init: U(-1/sqrt(fan_in), 1/sqrt(fan_in)), f32.

    Weights stored as [in_features, out_features]; biases as [1, out_features]."""
    dims = [(input_size, D1), (D1, D2), (D2, D3), (D3, D4), (D4, D_OUT)]
    params = []
    for (fan_in, fan_out) in dims:
        key, kw, kb = jax.random.split(key, 3)
        bound = 1.0 / jnp.sqrt(jnp.float32(fan_in))
        w = jax.random.uniform(kw, (fan_in, fan_out), jnp.float32, -bound, bound)
        b = jax.random.uniform(kb, (1, fan_out), jnp.float32, -bound, bound)
        params.append((w, b))
    return params


def prepare_params(params):
    """One-time conversion to the kernel layout: pad 528->640, bf16 weights, f32 biases.

    Keeps all padding / casting out of the per-call path."""
    (w1, b1), (w2, b2), (w3, b3), (w4, b4), (w5, b5) = params
    pad3 = D3_PAD - D3
    w3p = jnp.pad(w3, ((0, 0), (0, pad3)))     # extra sigmoid(0)=0.5 lanes ...
    b3p = jnp.pad(b3, ((0, 0), (0, pad3)))
    w4p = jnp.pad(w4, ((0, pad3), (0, 0)))     # ... cancelled by these zero rows
    w5r = w5.reshape(1, D4)                    # row vector for the trans-B final matmul
    bf = jnp.bfloat16
    return {
        "w1": w1.astype(bf),  "b1": b1,
        "w2": w2.astype(bf),  "b2": b2,
        "w3": w3p.astype(bf), "b3": b3p,
        "w4": w4p.astype(bf), "b4": b4,
        "w5": w5r.astype(bf), "b5": b5,
    }


def reference_forward(x, params):
    """Pure-JAX f32 reference of the same forward pass (un-padded, exp-based sigmoid)."""
    (w1, b1), (w2, b2), (w3, b3), (w4, b4), (w5, b5) = params
    sig = lambda t: 1.0 / (1.0 + jnp.exp(-t))
    h = sig(x @ w1 + b1)
    h = jnp.tanh(h @ w2 + b2)
    h = sig(h @ w3 + b3)
    h = jnp.tanh(h @ w4 + b4)
    return _leaky_relu(h @ w5 + b5)


if __name__ == "__main__":
    key = jax.random.PRNGKey(0)
    key, kx = jax.random.split(key)

    batch = 8          # small test batch
    input_size = 32    # small, arbitrary input feature size

    x = jax.random.normal(kx, (batch, input_size), jnp.float32)
    params = init_params(key, input_size)
    prepared = prepare_params(params)

    out = jax.block_until_ready(net_forward(x, prepared))
    ref = reference_forward(x, params)
    assert out.shape == (batch, 1)
    # bf16 MXU inputs -> relaxed tolerance vs the f32 reference.
    assert jnp.allclose(out, ref, atol=5e-2, rtol=5e-2), float(jnp.max(jnp.abs(out - ref)))

    # Exercise the multi-tile path + partial last tile (B=260 -> 2 tiles of 136).
    key, kx2 = jax.random.split(key)
    x2 = jax.random.normal(kx2, (260, input_size), jnp.float32)
    out2 = jax.block_until_ready(net_forward(x2, prepared))
    ref2 = reference_forward(x2, params)
    assert out2.shape == (260, 1)
    assert jnp.allclose(out2, ref2, atol=5e-2, rtol=5e-2), float(jnp.max(jnp.abs(out2 - ref2)))

    print("KERNEL_OK")
</pallas_src>

<mosaic_0001>
module attributes {stable_mosaic.version = 11 : i64} {
  func.func @mlp_kernel(%arg0: i32, %arg1: memref<8x32xf32, #tpu.memory_space<vmem>>, %arg2: memref<32x128xbf16, #tpu.memory_space<vmem>>, %arg3: memref<1x128xf32, #tpu.memory_space<vmem>>, %arg4: memref<128x256xbf16, #tpu.memory_space<vmem>>, %arg5: memref<1x256xf32, #tpu.memory_space<vmem>>, %arg6: memref<256x640xbf16, #tpu.memory_space<vmem>>, %arg7: memref<1x640xf32, #tpu.memory_space<vmem>>, %arg8: memref<640x128xbf16, #tpu.memory_space<vmem>>, %arg9: memref<1x128xf32, #tpu.memory_space<vmem>>, %arg10: memref<1x128xbf16, #tpu.memory_space<vmem>>, %arg11: memref<1x1xf32, #tpu.memory_space<vmem>>, %arg12: memref<1x8xf32, #tpu.memory_space<vmem>>) attributes {dimension_semantics = [#tpu.dimension_semantics<parallel>], iteration_bounds = array<i64: 1>, scalar_prefetch = 0 : i64, scratch_operands = 0 : i64, tpu.core_type = #tpu.core_type<tc>, window_params = [{transform_indices = @transform_0, window_bounds = array<i64: 8, 32>}, {pipeline_mode = #tpu.pipeline_mode<synchronous>, transform_indices = @transform_1, window_bounds = array<i64: 32, 128>}, {pipeline_mode = #tpu.pipeline_mode<synchronous>, transform_indices = @transform_2, window_bounds = array<i64: 1, 128>}, {pipeline_mode = #tpu.pipeline_mode<synchronous>, transform_indices = @transform_3, window_bounds = array<i64: 128, 256>}, {pipeline_mode = #tpu.pipeline_mode<synchronous>, transform_indices = @transform_4, window_bounds = array<i64: 1, 256>}, {pipeline_mode = #tpu.pipeline_mode<synchronous>, transform_indices = @transform_5, window_bounds = array<i64: 256, 640>}, {pipeline_mode = #tpu.pipeline_mode<synchronous>, transform_indices = @transform_6, window_bounds = array<i64: 1, 640>}, {pipeline_mode = #tpu.pipeline_mode<synchronous>, transform_indices = @transform_7, window_bounds = array<i64: 640, 128>}, {pipeline_mode = #tpu.pipeline_mode<synchronous>, transform_indices = @transform_8, window_bounds = array<i64: 1, 128>}, {pipeline_mode = #tpu.pipeline_mode<synchronous>, transform_indices = @transform_9, window_bounds = array<i64: 1, 128>}, {pipeline_mode = #tpu.pipeline_mode<synchronous>, transform_indices = @transform_10, window_bounds = array<i64: 1, 1>}, {transform_indices = @transform_11, window_bounds = array<i64: 1, 8>}]} {
    %c0 = arith.constant 0 : index
    %c0_0 = arith.constant 0 : index
    %0 = vector.load %arg1[%c0, %c0_0] : memref<8x32xf32, #tpu.memory_space<vmem>>, vector<8x32xf32>
    %1 = arith.truncf %0 : vector<8x32xf32> to vector<8x32xbf16>
    %c0_1 = arith.constant 0 : index
    %c0_2 = arith.constant 0 : index
    %2 = vector.load %arg2[%c0_1, %c0_2] : memref<32x128xbf16, #tpu.memory_space<vmem>>, vector<32x128xbf16>
    %cst = arith.constant dense<0.000000e+00> : vector<8x128xf32>
    %3 = tpu.matmul %1, %2, %cst {dimension_numbers = #tpu.dot_dimension_numbers<[1], [0], [0], [1], [0, 0, 1, 1], [], []>} : vector<8x32xbf16>, vector<32x128xbf16>, vector<8x128xf32> -> vector<8x128xf32>
    %c0_3 = arith.constant 0 : index
    %c0_4 = arith.constant 0 : index
    %4 = vector.load %arg3[%c0_3, %c0_4] : memref<1x128xf32, #tpu.memory_space<vmem>>, vector<1x128xf32>
    %5 = vector.broadcast %4 : vector<1x128xf32> to vector<8x128xf32>
    %6 = arith.addf %3, %5 : vector<8x128xf32>
    %cst_5 = arith.constant 5.000000e-01 : f32
    %7 = vector.broadcast %cst_5 : f32 to vector<8x128xf32>
    %8 = arith.mulf %7, %6 : vector<8x128xf32>
    %9 = math.tanh %8 : vector<8x128xf32>
    %cst_6 = arith.constant 1.000000e+00 : f32
    %10 = vector.broadcast %cst_6 : f32 to vector<8x128xf32>
    %11 = arith.addf %9, %10 : vector<8x128xf32>
    %cst_7 = arith.constant 5.000000e-01 : f32
    %12 = vector.broadcast %cst_7 : f32 to vector<8x128xf32>
    %13 = arith.mulf %12, %11 : vector<8x128xf32>
    %14 = arith.truncf %13 : vector<8x128xf32> to vector<8x128xbf16>
    %c0_8 = arith.constant 0 : index
    %c0_9 = arith.constant 0 : index
    %15 = vector.load %arg4[%c0_8, %c0_9] : memref<128x256xbf16, #tpu.memory_space<vmem>>, vector<128x256xbf16>
    %cst_10 = arith.constant dense<0.000000e+00> : vector<8x256xf32>
    %16 = tpu.matmul %14, %15, %cst_10 {dimension_numbers = #tpu.dot_dimension_numbers<[1], [0], [0], [1], [0, 0, 1, 1], [], []>} : vector<8x128xbf16>, vector<128x256xbf16>, vector<8x256xf32> -> vector<8x256xf32>
    %c0_11 = arith.constant 0 : index
    %c0_12 = arith.constant 0 : index
    %17 = vector.load %arg5[%c0_11, %c0_12] : memref<1x256xf32, #tpu.memory_space<vmem>>, vector<1x256xf32>
    %18 = vector.broadcast %17 : vector<1x256xf32> to vector<8x256xf32>
    %19 = arith.addf %16, %18 : vector<8x256xf32>
    %20 = math.tanh %19 : vector<8x256xf32>
    %21 = arith.truncf %20 : vector<8x256xf32> to vector<8x256xbf16>
    %c0_13 = arith.constant 0 : index
    %c0_14 = arith.constant 0 : index
    %22 = vector.load %arg6[%c0_13, %c0_14] : memref<256x640xbf16, #tpu.memory_space<vmem>>, vector<256x640xbf16>
    %cst_15 = arith.constant dense<0.000000e+00> : vector<8x640xf32>
    %23 = tpu.matmul %21, %22, %cst_15 {dimension_numbers = #tpu.dot_dimension_numbers<[1], [0], [0], [1], [0, 0, 1, 1], [], []>} : vector<8x256xbf16>, vector<256x640xbf16>, vector<8x640xf32> -> vector<8x640xf32>
    %c0_16 = arith.constant 0 : index
    %c0_17 = arith.constant 0 : index
    %24 = vector.load %arg7[%c0_16, %c0_17] : memref<1x640xf32, #tpu.memory_space<vmem>>, vector<1x640xf32>
    %25 = vector.broadcast %24 : vector<1x640xf32> to vector<8x640xf32>
    %26 = arith.addf %23, %25 : vector<8x640xf32>
    %cst_18 = arith.constant 5.000000e-01 : f32
    %27 = vector.broadcast %cst_18 : f32 to vector<8x640xf32>
    %28 = arith.mulf %27, %26 : vector<8x640xf32>
    %29 = math.tanh %28 : vector<8x640xf32>
    %cst_19 = arith.constant 1.000000e+00 : f32
    %30 = vector.broadcast %cst_19 : f32 to vector<8x640xf32>
    %31 = arith.addf %29, %30 : vector<8x640xf32>
    %cst_20 = arith.constant 5.000000e-01 : f32
    %32 = vector.broadcast %cst_20 : f32 to vector<8x640xf32>
    %33 = arith.mulf %32, %31 : vector<8x640xf32>
    %34 = arith.truncf %33 : vector<8x640xf32> to vector<8x640xbf16>
    %c0_21 = arith.constant 0 : index
    %c0_22 = arith.constant 0 : index
    %35 = vector.load %arg8[%c0_21, %c0_22] : memref<640x128xbf16, #tpu.memory_space<vmem>>, vector<640x128xbf16>
    %cst_23 = arith.constant dense<0.000000e+00> : vector<8x128xf32>
    %36 = tpu.matmul %34, %35, %cst_23 {dimension_numbers = #tpu.dot_dimension_numbers<[1], [0], [0], [1], [0, 0, 1, 1], [], []>} : vector<8x640xbf16>, vector<640x128xbf16>, vector<8x128xf32> -> vector<8x128xf32>
    %c0_24 = arith.constant 0 : index
    %c0_25 = arith.constant 0 : index
    %37 = vector.load %arg9[%c0_24, %c0_25] : memref<1x128xf32, #tpu.memory_space<vmem>>, vector<1x128xf32>
    %38 = vector.broadcast %37 : vector<1x128xf32> to vector<8x128xf32>
    %39 = arith.addf %36, %38 : vector<8x128xf32>
    %40 = math.tanh %39 : vector<8x128xf32>
    %c0_26 = arith.constant 0 : index
    %c0_27 = arith.constant 0 : index
    %41 = vector.load %arg10[%c0_26, %c0_27] : memref<1x128xbf16, #tpu.memory_space<vmem>>, vector<1x128xbf16>
    %42 = arith.truncf %40 : vector<8x128xf32> to vector<8x128xbf16>
    %cst_28 = arith.constant dense<0.000000e+00> : vector<1x8xf32>
    %43 = tpu.matmul %41, %42, %cst_28 {dimension_numbers = #tpu.dot_dimension_numbers<[1], [1], [0], [0], [0, 0, 1, 0], [], []>} : vector<1x128xbf16>, vector<8x128xbf16>, vector<1x8xf32> -> vector<1x8xf32>
    %c0_29 = arith.constant 0 : index
    %c0_30 = arith.constant 0 : index
    %44 = vector.load %arg11[%c0_29, %c0_30] : memref<1x1xf32, #tpu.memory_space<vmem>>, vector<1x1xf32>
    %45 = vector.broadcast %44 : vector<1x1xf32> to vector<1x8xf32>
    %46 = arith.addf %43, %45 : vector<1x8xf32>
    %cst_31 = arith.constant 0.000000e+00 : f32
    %47 = vector.broadcast %cst_31 : f32 to vector<1x8xf32>
    %48 = arith.cmpf oge, %46, %47 : vector<1x8xf32>
    %cst_32 = arith.constant 0.00999999977 : f32
    %49 = vector.broadcast %cst_32 : f32 to vector<1x8xf32>
    %50 = arith.mulf %49, %46 : vector<1x8xf32>
    %51 = arith.select %48, %46, %50 : vector<1x8xi1>, vector<1x8xf32>
    %c0_33 = arith.constant 0 : index
    %c0_34 = arith.constant 0 : index
    %52 = vector.load %arg12[%c0_33, %c0_34] : memref<1x8xf32, #tpu.memory_space<vmem>>, vector<1x8xf32>
    tpu.vector_store %arg12[%c0_33, %c0_34], %51 {strides = array<i32>} : memref<1x8xf32, #tpu.memory_space<vmem>>, vector<1x8xf32>,
    return
  }
  func.func @transform_0(%arg0: i32) -> (i32, i32) {
    %c0_i32 = arith.constant 0 : i32
    %c0_i32_0 = arith.constant 0 : i32
    return %arg0, %c0_i32 : i32, i32
  }
  func.func @transform_1(%arg0: i32) -> (i32, i32) {
    %c0_i32 = arith.constant 0 : i32
    %c0_i32_0 = arith.constant 0 : i32
    %c0_i32_1 = arith.constant 0 : i32
    return %c0_i32, %c0_i32_0 : i32, i32
  }
  func.func @transform_2(%arg0: i32) -> (i32, i32) {
    %c0_i32 = arith.constant 0 : i32
    %c0_i32_0 = arith.constant 0 : i32
    %c0_i32_1 = arith.constant 0 : i32
    return %c0_i32, %c0_i32_0 : i32, i32
  }
  func.func @transform_3(%arg0: i32) -> (i32, i32) {
    %c0_i32 = arith.constant 0 : i32
    %c0_i32_0 = arith.constant 0 : i32
    %c0_i32_1 = arith.constant 0 : i32
    return %c0_i32, %c0_i32_0 : i32, i32
  }
  func.func @transform_4(%arg0: i32) -> (i32, i32) {
    %c0_i32 = arith.constant 0 : i32
    %c0_i32_0 = arith.constant 0 : i32
    %c0_i32_1 = arith.constant 0 : i32
    return %c0_i32, %c0_i32_0 : i32, i32
  }
  func.func @transform_5(%arg0: i32) -> (i32, i32) {
    %c0_i32 = arith.constant 0 : i32
    %c0_i32_0 = arith.constant 0 : i32
    %c0_i32_1 = arith.constant 0 : i32
    return %c0_i32, %c0_i32_0 : i32, i32
  }
  func.func @transform_6(%arg0: i32) -> (i32, i32) {
    %c0_i32 = arith.constant 0 : i32
    %c0_i32_0 = arith.constant 0 : i32
    %c0_i32_1 = arith.constant 0 : i32
    return %c0_i32, %c0_i32_0 : i32, i32
  }
  func.func @transform_7(%arg0: i32) -> (i32, i32) {
    %c0_i32 = arith.constant 0 : i32
    %c0_i32_0 = arith.constant 0 : i32
    %c0_i32_1 = arith.constant 0 : i32
    return %c0_i32, %c0_i32_0 : i32, i32
  }
  func.func @transform_8(%arg0: i32) -> (i32, i32) {
    %c0_i32 = arith.constant 0 : i32
    %c0_i32_0 = arith.constant 0 : i32
    %c0_i32_1 = arith.constant 0 : i32
    return %c0_i32, %c0_i32_0 : i32, i32
  }
  func.func @transform_9(%arg0: i32) -> (i32, i32) {
    %c0_i32 = arith.constant 0 : i32
    %c0_i32_0 = arith.constant 0 : i32
    %c0_i32_1 = arith.constant 0 : i32
    return %c0_i32, %c0_i32_0 : i32, i32
  }
  func.func @transform_10(%arg0: i32) -> (i32, i32) {
    %c0_i32 = arith.constant 0 : i32
    %c0_i32_0 = arith.constant 0 : i32
    %c0_i32_1 = arith.constant 0 : i32
    return %c0_i32, %c0_i32_0 : i32, i32
  }
  func.func @transform_11(%arg0: i32) -> (i32, i32) {
    %c0_i32 = arith.constant 0 : i32
    %c0_i32_0 = arith.constant 0 : i32
    return %arg0, %c0_i32 : i32, i32
  }
}

</mosaic_0001>

<llo_original>
// kernel: net_forward.1
$region0: #{net_forward.1}
  #allocation0 [shape = 'u32[]', space=smem, size = 0x4, offset = 0x4, fixed_abs, tag = 'smem constant byte address 0x4 - core index']
  #allocation1 [shape = 'u32[144,128]{1,0:T(1,128)}', space=vmem, size = 0x12000, scoped, tag = 'internal scratch']
  #allocation2 [shape = 'f32[1,1]{1,0:T(1,128)S(1)}', space=vmem, size = 0x200, scoped, tag = 'scoped memory for net_forward.1']
  %s0 = inlined_call_operand.hbm [shape: f32[8,32], index: 0, kind: input, shape index: {}]
  %s1 = inlined_call_operand.hbm [shape: bf16[32,128], index: 1, kind: input, shape index: {}]
  %s2 = inlined_call_operand.hbm [shape: f32[1,128], index: 2, kind: input, shape index: {}]
  %s3 = inlined_call_operand.hbm [shape: bf16[128,256], index: 3, kind: input, shape index: {}]
  %s4 = inlined_call_operand.vmem [shape: f32[1,256], index: 4, kind: input, shape index: {}]
  %s5 = inlined_call_operand.hbm [shape: bf16[256,640], index: 5, kind: input, shape index: {}]
  %s6 = inlined_call_operand.vmem [shape: f32[1,640], index: 6, kind: input, shape index: {}]
  %s7 = inlined_call_operand.hbm [shape: bf16[640,128], index: 7, kind: input, shape index: {}]
  %s8 = inlined_call_operand.vmem [shape: f32[1,128], index: 8, kind: input, shape index: {}]
  %s9 = inlined_call_operand.vmem [shape: bf16[1,128], index: 9, kind: input, shape index: {}]
  %s10 = inlined_call_operand.<no memory space> [shape: f32[1,1], index: 10, kind: input, shape index: {}]
  %s11 = inlined_call_operand.hbm [shape: f32[1,8], index: 11, kind: output, shape index: {}]
  %s12 = sld [smem:[#allocation0]]
  $region78: #{net_forward.1} parent=0
    _
  %s14 = ssub.s32 1, %s12
  %s15 = scalar_select 0, %s14, %s12
  %v16 = vstv %s10
  %17 = vst [vmem:[#allocation2] sm:$0x1] %v16
  $region1: #{net_forward.1} parent=0
    #allocation3 [shape = 'u8[4096]{0}', space=vmem, size = 0x1000, scoped, tag = 'input window, operand 0, single buffered']
    #allocation4 [shape = 's32[1]{0}', space=sflag, size = 0x4, scoped, tag = 'scoped memory for net_forward.1']
    #allocation5 [shape = 's32[1]{0}', space=sflag, size = 0x4, scoped, tag = 'scoped memory for net_forward.1']
    #allocation6 [shape = 'u8[8192]{0}', space=vmem, size = 0x2000, scoped, tag = 'input window, operand 1, single buffered']
    #allocation7 [shape = 's32[1]{0}', space=sflag, size = 0x4, scoped, tag = 'scoped memory for net_forward.1']
    #allocation8 [shape = 'u8[512]{0}', space=vmem, size = 0x400, scoped, tag = 'input window, operand 2, single buffered']
    #allocation9 [shape = 'u8[65536]{0}', space=vmem, size = 0x10000, scoped, tag = 'input window, operand 3, single buffered']
    #allocation10 [shape = 's32[1]{0}', space=sflag, size = 0x4, scoped, tag = 'scoped memory for net_forward.1']
    #allocation11 [shape = 'u8[327680]{0}', space=vmem, size = 0x50000, scoped, tag = 'input window, operand 5, single buffered']
    #allocation12 [shape = 'u8[163840]{0}', space=vmem, size = 0x28000, scoped, tag = 'input window, operand 7, single buffered']
    #allocation13 [shape = 's32[1]{0}', space=sflag, size = 0x4, scoped, tag = 'scoped memory for net_forward.1']
    #allocation14 [shape = 'u8[512]{0}', space=vmem, size = 0x400, scoped, tag = 'output window, operand 0, single buffered']
    %18 = vsyncpa [#allocation4], 0
    %19 = vsyncpa [#allocation7], 0
    %20 = vsyncpa [#allocation10], 0
    %21 = vsyncpa [#allocation13], 0
    %22 = vsyncpa [#allocation5], 0
    // Predicated region
    $region2: #{net_forward.1} parent=1 // pred_check
      _
    $region3: #{net_forward.1} parent=1 // pred_check_branch
      %24 = sbr.rel (0) target = $region5
    $region4: #{net_forward.1} parent=1 // pred_region
      %s26 = ssub.s32 128, 128
      %27 = vsyncadd [#allocation4], %s26
      %s29 = sshll.u32 [#allocation3], 4
      %s30 = int_to_ptr.vmem [resolvable:$true] %s29
      %32 = dma.hbm_to_vmem [thread:$0]  %s0, 128, %s30, [#allocation4]
    $region5: #{net_forward.1} parent=1 // pred_fallthru
      _
    // Predicated region
    $region6: #{net_forward.1} parent=1 // pred_check
      _
    $region7: #{net_forward.1} parent=1 // pred_check_branch
      %34 = sbr.rel (0) target = $region9
    $region8: #{net_forward.1} parent=1 // pred_region
      %s36 = ssub.s32 256, 256
      %37 = vsyncadd [#allocation7], %s36
      %s38 = sshll.u32 [#allocation6], 4
      %s39 = int_to_ptr.vmem [resolvable:$true] %s38
      %44 = dma.hbm_to_vmem [thread:$0]  %s1, 256, %s39, [#allocation7], 64, 64, 4
    $region9: #{net_forward.1} parent=1 // pred_fallthru
      _
    // Predicated region
    $region10: #{net_forward.1} parent=1 // pred_check
      _
    $region11: #{net_forward.1} parent=1 // pred_check_branch
      %46 = sbr.rel (0) target = $region13
    $region12: #{net_forward.1} parent=1 // pred_region
      %s48 = ssub.s32 16, 16
      %49 = vsyncadd [#allocation7], %s48
      %s51 = sshll.u32 [#allocation8], 4
      %s52 = int_to_ptr.vmem [resolvable:$true] %s51
      %54 = dma.hbm_to_vmem [thread:$0]  %s2, 16, %s52, [#allocation7]
    $region13: #{net_forward.1} parent=1 // pred_fallthru
      _
    // Predicated region
    $region14: #{net_forward.1} parent=1 // pred_check
      _
    $region15: #{net_forward.1} parent=1 // pred_check_branch
      %56 = sbr.rel (0) target = $region17
    $region16: #{net_forward.1} parent=1 // pred_region
      %s58 = ssub.s32 2048, 2048
      %59 = vsyncadd [#allocation10], %s58
      %s60 = sshll.u32 [#allocation9], 4
      %s61 = int_to_ptr.vmem [resolvable:$true] %s60
      %66 = dma.hbm_to_vmem [thread:$0]  %s3, 2048, %s61, [#allocation10], 128, 128, 8
    $region17: #{net_forward.1} parent=1 // pred_fallthru
      _
    // Predicated region
    $region18: #{net_forward.1} parent=1 // pred_check
      _
    $region19: #{net_forward.1} parent=1 // pred_check_branch
      %68 = sbr.rel (0) target = $region21
    $region20: #{net_forward.1} parent=1 // pred_region
      _
    $region21: #{net_forward.1} parent=1 // pred_fallthru
      _
    // Predicated region
    $region22: #{net_forward.1} parent=1 // pred_check
      _
    $region23: #{net_forward.1} parent=1 // pred_check_branch
      %70 = sbr.rel (0) target = $region25
    $region24: #{net_forward.1} parent=1 // pred_region
      %s72 = ssub.s32 10240, 10240
      %73 = vsyncadd [#allocation10], %s72
      %s74 = sshll.u32 [#allocation11], 4
      %s75 = int_to_ptr.vmem [resolvable:$true] %s74
      %80 = dma.hbm_to_vmem [thread:$0]  %s5, 10240, %s75, [#allocation10], 320, 320, 20
    $region25: #{net_forward.1} parent=1 // pred_fallthru
      _
    // Predicated region
    $region26: #{net_forward.1} parent=1 // pred_check
      _
    $region27: #{net_forward.1} parent=1 // pred_check_branch
      %82 = sbr.rel (0) target = $region29
    $region28: #{net_forward.1} parent=1 // pred_region
      _
    $region29: #{net_forward.1} parent=1 // pred_fallthru
      _
    // Predicated region
    $region30: #{net_forward.1} parent=1 // pred_check
      _
    $region31: #{net_forward.1} parent=1 // pred_check_branch
      %84 = sbr.rel (0) target = $region33
    $region32: #{net_forward.1} parent=1 // pred_region
      %s86 = ssub.s32 5120, 5120
      %87 = vsyncadd [#allocation13], %s86
      %s88 = sshll.u32 [#allocation12], 4
      %s89 = int_to_ptr.vmem [resolvable:$true] %s88
      %94 = dma.hbm_to_vmem [thread:$0]  %s7, 5120, %s89, [#allocation13], 64, 64, 4
    $region33: #{net_forward.1} parent=1 // pred_fallthru
      _
    // Predicated region
    $region34: #{net_forward.1} parent=1 // pred_check
      _
    $region35: #{net_forward.1} parent=1 // pred_check_branch
      %96 = sbr.rel (0) target = $region37
    $region36: #{net_forward.1} parent=1 // pred_region
      _
    $region37: #{net_forward.1} parent=1 // pred_fallthru
      _
    // Predicated region
    $region38: #{net_forward.1} parent=1 // pred_check
      _
    $region39: #{net_forward.1} parent=1 // pred_check_branch
      %98 = sbr.rel (0) target = $region41
    $region40: #{net_forward.1} parent=1 // pred_region
      _
    $region41: #{net_forward.1} parent=1 // pred_fallthru
      _
    // Predicated region
    $region42: #{net_forward.1} parent=1 // pred_check
      _
    $region43: #{net_forward.1} parent=1 // pred_check_branch
      %100 = sbr.rel (0) target = $region45
    $region44: #{net_forward.1} parent=1 // pred_region
      _
    $region45: #{net_forward.1} parent=1 // pred_fallthru
      _
    // Predicated region
    $region46: #{net_forward.1} parent=1 // pred_check
      _
    $region47: #{net_forward.1} parent=1 // pred_check_branch
      %102 = sbr.rel (0) target = $region49
    $region48: #{net_forward.1} parent=1 // pred_region
      %103 = dma.done [#allocation4], 128
    $region49: #{net_forward.1} parent=1 // pred_fallthru
      _
    // Predicated region
    $region50: #{net_forward.1} parent=1 // pred_check
      _
    $region51: #{net_forward.1} parent=1 // pred_check_branch
      %105 = sbr.rel (0) target = $region53
    $region52: #{net_forward.1} parent=1 // pred_region
      %106 = dma.done [#allocation7], 256
    $region53: #{net_forward.1} parent=1 // pred_fallthru
      _
    // Predicated region
    $region54: #{net_forward.1} parent=1 // pred_check
      _
    $region55: #{net_forward.1} parent=1 // pred_check_branch
      %108 = sbr.rel (0) target = $region57
    $region56: #{net_forward.1} parent=1 // pred_region
      %109 = dma.done [#allocation7], 16
    $region57: #{net_forward.1} parent=1 // pred_fallthru
      _
    // Predicated region
    $region58: #{net_forward.1} parent=1 // pred_check
      _
    $region59: #{net_forward.1} parent=1 // pred_check_branch
      %111 = sbr.rel (0) target = $region61
    $region60: #{net_forward.1} parent=1 // pred_region
      %112 = dma.done [#allocation10], 2048
    $region61: #{net_forward.1} parent=1 // pred_fallthru
      _
    // Predicated region
    $region62: #{net_forward.1} parent=1 // pred_check
      _
    $region63: #{net_forward.1} parent=1 // pred_check_branch
      %114 = sbr.rel (0) target = $region65
    $region64: #{net_forward.1} parent=1 // pred_region
      %115 = dma.done [#allocation10], 10240
    $region65: #{net_forward.1} parent=1 // pred_fallthru
      _
    // Predicated region
    $region66: #{net_forward.1} parent=1 // pred_check
      _
    $region67: #{net_forward.1} parent=1 // pred_check_branch
      %117 = sbr.rel (0) target = $region69
    $region68: #{net_forward.1} parent=1 // pred_region
      %118 = dma.done [#allocation13], 5120
    $region69: #{net_forward.1} parent=1 // pred_fallthru
      _
    %v120 = vld [vmem:[#allocation3] sm:$0xff]
    %v121 = vpack.c.bf16 %v120, %v120
    %v122 = vld [vmem:[#allocation6] sm:$0xf]
    %v123 = vld [vmem:[#allocation6 + $0x4] sm:$0xf]
    %v124 = vld [vmem:[#allocation6 + $0x8] sm:$0xf]
    %v125 = vld [vmem:[#allocation6 + $0xc] sm:$0xf]
    %v126 = vld [vmem:[#allocation8] sm:$0x1]
    %v128 = vlaneseq
    %v129 = vshrl.u32 %v128, 7
    %v130 = vsub.s32 0, %v129
    %v131 = vrot.slane %v126, %v130
    %v137 = vunpack.c.l.b16 %v122
    %v138 = vunpack.c.l.b16 %v123
    %v139 = vunpack.c.l.b16 %v124
    %v140 = vunpack.c.l.b16 %v125
    %v141 = vpack.c.b16 %v138, %v137
    %v142 = vpack.c.b16 %v140, %v139
    %vm145 = vcmask 261120
    %v147 = vsel %vm145, %v121, 0
    %149 = vmatprep.subr.bf16.mxu0 0
    %150 = vmatpush1.bf16.msra.mxu0 0
    %151 = vmatprep.subr.bf16.mxu0 0
    %152 = vmatpush1.bf16.msra.mxu0 0
    %153 = vmatprep.subr.bf16.mxu0 0
    %154 = vmatpush1.bf16.msra.mxu0 0
    %155 = vmatprep.subr.bf16.mxu0 0
    %156 = vmatpush1.bf16.msra.mxu0 0
    %157 = vmatprep.subr.bf16.mxu0 0
    %158 = vmatpush1.bf16.msra.mxu0 0
    %159 = vmatprep.subr.bf16.mxu0 0
    %160 = vmatpush1.bf16.msra.mxu0 0
    %161 = vmatprep.subr.bf16.mxu0 0
    %162 = vmatpush1.bf16.msra.mxu0 %v142
    %163 = vmatprep.subr.bf16.mxu0 0
    %164 = vmatpush1.bf16.msra.mxu0 %v141
    %165 = vmatprep.subr.bf16.mxu0 0
    %166 = vmatpush2.bf16.msra.mxu0 0
    %167 = vmatprep.subr.bf16.mxu0 0
    %168 = vmatpush2.bf16.msra.mxu0 0
    %169 = vmatprep.subr.bf16.mxu0 0
    %170 = vmatpush2.bf16.msra.mxu0 0
    %171 = vmatprep.subr.bf16.mxu0 0
    %172 = vmatpush2.bf16.msra.mxu0 0
    %173 = vmatprep.subr.bf16.mxu0 0
    %174 = vmatpush2.bf16.msra.mxu0 0
    %175 = vmatprep.subr.bf16.mxu0 0
    %176 = vmatpush2.bf16.msra.mxu0 0
    %177 = vmatprep.subr.bf16.mxu0 0
    %178 = vmatpush2.bf16.msra.mxu0 0
    %179 = vmatprep.subr.bf16.mxu0 0
    %180 = vmatpush2.bf16.msra.mxu0 0
    %181 = vmatprep.mubr.bf16.mxu0 0
    %182 = vmatmul.mubr.bf16.gmra.mxu0 %v147
    %v183 = vpop.f32.mrf.mxu0
    %v184 = vadd.f32 %v131, %v183
    %v185 = vpop.f32.mrf.mxu0
    %v186 = vpop.f32.mrf.mxu0
    %v187 = vpop.f32.mrf.mxu0
    %188 = vdwg.mxu0
    %v189 = vmul.f32 %v184, 0.5
    %v190 = vtanh.pop %v189
    %v191 = vadd.f32 %v190, 1.0
    %v192 = vmul.f32 %v191, 0.5
    %v193 = vpack.c.bf16 %v192, %v192
    %v194 = vld [vmem:[#allocation9] sm:$0xff]
    %v195 = vld [vmem:[#allocation9 + $0x8] sm:$0xff]
    %v196 = vld [vmem:[#allocation9 + $0x10] sm:$0xff]
    %v197 = vld [vmem:[#allocation9 + $0x18] sm:$0xff]
    %v198 = vld [vmem:[#allocation9 + $0x20] sm:$0xff]
    %v199 = vld [vmem:[#allocation9 + $0x28] sm:$0xff]
    %v200 = vld [vmem:[#allocation9 + $0x30] sm:$0xff]
    %v201 = vld [vmem:[#allocation9 + $0x38] sm:$0xff]
    %v202 = vld [vmem:[#allocation9 + $0x40] sm:$0xff]
    %v203 = vld [vmem:[#allocation9 + $0x48] sm:$0xff]
    %v204 = vld [vmem:[#allocation9 + $0x50] sm:$0xff]
    %v205 = vld [vmem:[#allocation9 + $0x58] sm:$0xff]
    %v206 = vld [vmem:[#allocation9 + $0x60] sm:$0xff]
    %v207 = vld [vmem:[#allocation9 + $0x68] sm:$0xff]
    %v208 = vld [vmem:[#allocation9 + $0x70] sm:$0xff]
    %v209 = vld [vmem:[#allocation9 + $0x78] sm:$0xff]
    %v210 = vld [vmem:[%s4] sm:$0x3]
    %v212 = vlaneseq
    %v213 = vshrl.u32 %v212, 7
    %v214 = vsub.s32 0, %v213
    %v215 = vrot.slane %v210, %v214
    %v216 = vlaneseq
    %v217 = vshrl.u32 %v216, 7
    %v218 = vsub.s32 1, %v217
    %v219 = vrot.slane %v210, %v218
    %v238 = vunpack.c.l.b16 %v194
    %v239 = vunpack.c.h.b16 %v194
    %v240 = vunpack.c.l.b16 %v195
    %v241 = vunpack.c.h.b16 %v195
    %v242 = vunpack.c.l.b16 %v196
    %v243 = vunpack.c.h.b16 %v196
    %v244 = vunpack.c.l.b16 %v197
    %v245 = vunpack.c.h.b16 %v197
    %v246 = vunpack.c.l.b16 %v198
    %v247 = vunpack.c.h.b16 %v198
    %v248 = vunpack.c.l.b16 %v199
    %v249 = vunpack.c.h.b16 %v199
    %v250 = vunpack.c.l.b16 %v200
    %v251 = vunpack.c.h.b16 %v200
    %v252 = vunpack.c.l.b16 %v201
    %v253 = vunpack.c.h.b16 %v201
    %v254 = vunpack.c.l.b16 %v202
    %v255 = vunpack.c.h.b16 %v202
    %v256 = vunpack.c.l.b16 %v203
    %v257 = vunpack.c.h.b16 %v203
    %v258 = vunpack.c.l.b16 %v204
    %v259 = vunpack.c.h.b16 %v204
    %v260 = vunpack.c.l.b16 %v205
    %v261 = vunpack.c.h.b16 %v205
    %v262 = vunpack.c.l.b16 %v206
    %v263 = vunpack.c.h.b16 %v206
    %v264 = vunpack.c.l.b16 %v207
    %v265 = vunpack.c.h.b16 %v207
    %v266 = vunpack.c.l.b16 %v208
    %v267 = vunpack.c.h.b16 %v208
    %v268 = vunpack.c.l.b16 %v209
    %v269 = vunpack.c.h.b16 %v209
    %v270 = vpack.c.b16 %v240, %v238
    %v271 = vpack.c.b16 %v241, %v239
    %v272 = vpack.c.b16 %v244, %v242
    %v273 = vpack.c.b16 %v245, %v243
    %v274 = vpack.c.b16 %v248, %v246
    %v275 = vpack.c.b16 %v249, %v247
    %v276 = vpack.c.b16 %v252, %v250
    %v277 = vpack.c.b16 %v253, %v251
    %v278 = vpack.c.b16 %v256, %v254
    %v279 = vpack.c.b16 %v257, %v255
    %v280 = vpack.c.b16 %v260, %v258
    %v281 = vpack.c.b16 %v261, %v259
    %v282 = vpack.c.b16 %v264, %v262
    %v283 = vpack.c.b16 %v265, %v263
    %v284 = vpack.c.b16 %v268, %v266
    %v285 = vpack.c.b16 %v269, %v267
    %302 = vmatprep.subr.bf16.mxu0 %v285
    %303 = vmatpush1.bf16.msra.mxu0 %v284
    %304 = vmatprep.subr.bf16.mxu0 %v283
    %305 = vmatpush1.bf16.msra.mxu0 %v282
    %306 = vmatprep.subr.bf16.mxu0 %v281
    %307 = vmatpush1.bf16.msra.mxu0 %v280
    %308 = vmatprep.subr.bf16.mxu0 %v279
    %309 = vmatpush1.bf16.msra.mxu0 %v278
    %310 = vmatprep.subr.bf16.mxu0 %v277
    %311 = vmatpush1.bf16.msra.mxu0 %v276
    %312 = vmatprep.subr.bf16.mxu0 %v275
    %313 = vmatpush1.bf16.msra.mxu0 %v274
    %314 = vmatprep.subr.bf16.mxu0 %v273
    %315 = vmatpush1.bf16.msra.mxu0 %v272
    %316 = vmatprep.subr.bf16.mxu0 %v271
    %317 = vmatpush1.bf16.msra.mxu0 %v270
    %318 = vmatprep.subr.bf16.mxu0 0
    %319 = vmatpush2.bf16.msra.mxu0 0
    %320 = vmatprep.subr.bf16.mxu0 0
    %321 = vmatpush2.bf16.msra.mxu0 0
    %322 = vmatprep.subr.bf16.mxu0 0
    %323 = vmatpush2.bf16.msra.mxu0 0
    %324 = vmatprep.subr.bf16.mxu0 0
    %325 = vmatpush2.bf16.msra.mxu0 0
    %326 = vmatprep.subr.bf16.mxu0 0
    %327 = vmatpush2.bf16.msra.mxu0 0
    %328 = vmatprep.subr.bf16.mxu0 0
    %329 = vmatpush2.bf16.msra.mxu0 0
    %330 = vmatprep.subr.bf16.mxu0 0
    %331 = vmatpush2.bf16.msra.mxu0 0
    %332 = vmatprep.subr.bf16.mxu0 0
    %333 = vmatpush2.bf16.msra.mxu0 0
    %334 = vmatprep.mubr.bf16.mxu0 0
    %335 = vmatmul.mubr.bf16.gmra.mxu0 %v193
    %v336 = vpop.f32.mrf.mxu0
    %v337 = vadd.f32 %v215, %v336
    %v338 = vpop.f32.mrf.mxu0
    %v339 = vadd.f32 %v219, %v338
    %v340 = vpop.f32.mrf.mxu0
    %v341 = vpop.f32.mrf.mxu0
    %342 = vdwg.mxu0
    %v343 = vtanh.pop %v337
    %v344 = vtanh.pop %v339
    %v345 = vpack.c.bf16 %v343, %v343
    %v346 = vpack.c.bf16 %v344, %v344
    %v347 = vld [vmem:[#allocation11] sm:$0xff]
    %v348 = vld [vmem:[#allocation11 + $0x8] sm:$0xff]
    %v349 = vld [vmem:[#allocation11 + $0x10] sm:$0xf]
    %v350 = vld [vmem:[#allocation11 + $0x14] sm:$0xff]
    %v351 = vld [vmem:[#allocation11 + $0x1c] sm:$0xff]
    %v352 = vld [vmem:[#allocation11 + $0x24] sm:$0xf]
    %v353 = vld [vmem:[#allocation11 + $0x28] sm:$0xff]
    %v354 = vld [vmem:[#allocation11 + $0x30] sm:$0xff]
    %v355 = vld [vmem:[#allocation11 + $0x38] sm:$0xf]
    %v356 = vld [vmem:[#allocation11 + $0x3c] sm:$0xff]
    %v357 = vld [vmem:[#allocation11 + $0x44] sm:$0xff]
    %v358 = vld [vmem:[#allocation11 + $0x4c] sm:$0xf]
    %v359 = vld [vmem:[#allocation11 + $0x50] sm:$0xff]
    %v360 = vld [vmem:[#allocation11 + $0x58] sm:$0xff]
    %v361 = vld [vmem:[#allocation11 + $0x60] sm:$0xf]
    %v362 = vld [vmem:[#allocation11 + $0x64] sm:$0xff]
    %v363 = vld [vmem:[#allocation11 + $0x6c] sm:$0xff]
    %v364 = vld [vmem:[#allocation11 + $0x74] sm:$0xf]
    %v365 = vld [vmem:[#allocation11 + $0x78] sm:$0xff]
    %v366 = vld [vmem:[#allocation11 + $0x80] sm:$0xff]
    %v367 = vld [vmem:[#allocation11 + $0x88] sm:$0xf]
    %v368 = vld [vmem:[#allocation11 + $0x8c] sm:$0xff]
    %v369 = vld [vmem:[#allocation11 + $0x94] sm:$0xff]
    %v370 = vld [vmem:[#allocation11 + $0x9c] sm:$0xf]
    %v371 = vld [vmem:[#allocation11 + $0xa0] sm:$0xff]
    %v372 = vld [vmem:[#allocation11 + $0xa8] sm:$0xff]
    %v373 = vld [vmem:[#allocation11 + $0xb0] sm:$0xf]
    %v374 = vld [vmem:[#allocation11 + $0xb4] sm:$0xff]
    %v375 = vld [vmem:[#allocation11 + $0xbc] sm:$0xff]
    %v376 = vld [vmem:[#allocation11 + $0xc4] sm:$0xf]
    %v377 = vld [vmem:[#allocation11 + $0xc8] sm:$0xff]
    %v378 = vld [vmem:[#allocation11 + $0xd0] sm:$0xff]
    %v379 = vld [vmem:[#allocation11 + $0xd8] sm:$0xf]
    %v380 = vld [vmem:[#allocation11 + $0xdc] sm:$0xff]
    %v381 = vld [vmem:[#allocation11 + $0xe4] sm:$0xff]
    %v382 = vld [vmem:[#allocation11 + $0xec] sm:$0xf]
    %v383 = vld [vmem:[#allocation11 + $0xf0] sm:$0xff]
    %v384 = vld [vmem:[#allocation11 + $0xf8] sm:$0xff]
    %v385 = vld [vmem:[#allocation11 + $0x100] sm:$0xf]
    %v386 = vld [vmem:[#allocation11 + $0x104] sm:$0xff]
    %v387 = vld [vmem:[#allocation11 + $0x10c] sm:$0xff]
    %v388 = vld [vmem:[#allocation11 + $0x114] sm:$0xf]
    %v389 = vld [vmem:[#allocation11 + $0x118] sm:$0xff]
    %v390 = vld [vmem:[#allocation11 + $0x120] sm:$0xff]
    %v391 = vld [vmem:[#allocation11 + $0x128] sm:$0xf]
    %v392 = vld [vmem:[#allocation11 + $0x12c] sm:$0xff]
    %v393 = vld [vmem:[#allocation11 + $0x134] sm:$0xff]
    %v394 = vld [vmem:[#allocation11 + $0x13c] sm:$0xf]
    %v395 = vld [vmem:[#allocation11 + $0x140] sm:$0xff]
    %v396 = vld [vmem:[#allocation11 + $0x148] sm:$0xff]
    %v397 = vld [vmem:[#allocation11 + $0x150] sm:$0xf]
    %v398 = vld [vmem:[#allocation11 + $0x154] sm:$0xff]
    %v399 = vld [vmem:[#allocation11 + $0x15c] sm:$0xff]
    %v400 = vld [vmem:[#allocation11 + $0x164] sm:$0xf]
    %v401 = vld [vmem:[#allocation11 + $0x168] sm:$0xff]
    %v402 = vld [vmem:[#allocation11 + $0x170] sm:$0xff]
    %v403 = vld [vmem:[#allocation11 + $0x178] sm:$0xf]
    %v404 = vld [vmem:[#allocation11 + $0x17c] sm:$0xff]
    %v405 = vld [vmem:[#allocation11 + $0x184] sm:$0xff]
    %v406 = vld [vmem:[#allocation11 + $0x18c] sm:$0xf]
    %v407 = vld [vmem:[#allocation11 + $0x190] sm:$0xff]
    %v408 = vld [vmem:[#allocation11 + $0x198] sm:$0xff]
    %v409 = vld [vmem:[#allocation11 + $0x1a0] sm:$0xf]
    %v410 = vld [vmem:[#allocation11 + $0x1a4] sm:$0xff]
    %v411 = vld [vmem:[#allocation11 + $0x1ac] sm:$0xff]
    %v412 = vld [vmem:[#allocation11 + $0x1b4] sm:$0xf]
    %v413 = vld [vmem:[#allocation11 + $0x1b8] sm:$0xff]
    %v414 = vld [vmem:[#allocation11 + $0x1c0] sm:$0xff]
    %v415 = vld [vmem:[#allocation11 + $0x1c8] sm:$0xf]
    %v416 = vld [vmem:[#allocation11 + $0x1cc] sm:$0xff]
    %v417 = vld [vmem:[#allocation11 + $0x1d4] sm:$0xff]
    %v418 = vld [vmem:[#allocation11 + $0x1dc] sm:$0xf]
    %v419 = vld [vmem:[#allocation11 + $0x1e0] sm:$0xff]
    %v420 = vld [vmem:[#allocation11 + $0x1e8] sm:$0xff]
    %v421 = vld [vmem:[#allocation11 + $0x1f0] sm:$0xf]
    %v422 = vld [vmem:[#allocation11 + $0x1f4] sm:$0xff]
    %v423 = vld [vmem:[#allocation11 + $0x1fc] sm:$0xff]
    %v424 = vld [vmem:[#allocation11 + $0x204] sm:$0xf]
    %v425 = vld [vmem:[#allocation11 + $0x208] sm:$0xff]
    %v426 = vld [vmem:[#allocation11 + $0x210] sm:$0xff]
    %v427 = vld [vmem:[#allocation11 + $0x218] sm:$0xf]
    %v428 = vld [vmem:[#allocation11 + $0x21c] sm:$0xff]
    %v429 = vld [vmem:[#allocation11 + $0x224] sm:$0xff]
    %v430 = vld [vmem:[#allocation11 + $0x22c] sm:$0xf]
    %v431 = vld [vmem:[#allocation11 + $0x230] sm:$0xff]
    %v432 = vld [vmem:[#allocation11 + $0x238] sm:$0xff]
    %v433 = vld [vmem:[#allocation11 + $0x240] sm:$0xf]
    %v434 = vld [vmem:[#allocation11 + $0x244] sm:$0xff]
    %v435 = vld [vmem:[#allocation11 + $0x24c] sm:$0xff]
    %v436 = vld [vmem:[#allocation11 + $0x254] sm:$0xf]
    %v437 = vld [vmem:[#allocation11 + $0x258] sm:$0xff]
    %v438 = vld [vmem:[#allocation11 + $0x260] sm:$0xff]
    %v439 = vld [vmem:[#allocation11 + $0x268] sm:$0xf]
    %v440 = vld [vmem:[#allocation11 + $0x26c] sm:$0xff]
    %v441 = vld [vmem:[#allocation11 + $0x274] sm:$0xff]
    %v442 = vld [vmem:[#allocation11 + $0x27c] sm:$0xf]
    %v443 = vld [vmem:[%s6] sm:$0x1f]
    %v445 = vlaneseq
    %v446 = vshrl.u32 %v445, 7
    %v447 = vsub.s32 0, %v446
    %v448 = vrot.slane %v443, %v447
    %v449 = vlaneseq
    %v450 = vshrl.u32 %v449, 7
    %v451 = vsub.s32 1, %v450
    %v452 = vrot.slane %v443, %v451
    %v453 = vlaneseq
    %v454 = vshrl.u32 %v453, 7
    %v455 = vsub.s32 2, %v454
    %v456 = vrot.slane %v443, %v455
    %v457 = vlaneseq
    %v458 = vshrl.u32 %v457, 7
    %v459 = vsub.s32 3, %v458
    %v460 = vrot.slane %v443, %v459
    %v461 = vlaneseq
    %v462 = vshrl.u32 %v461, 7
    %v463 = vsub.s32 4, %v462
    %v464 = vrot.slane %v443, %v463
    %v566 = vunpack.c.l.b16 %v347
    %v567 = vunpack.c.h.b16 %v347
    %v568 = vunpack.c.l.b16 %v348
    %v569 = vunpack.c.h.b16 %v348
    %v570 = vunpack.c.l.b16 %v349
    %v571 = vunpack.c.l.b16 %v350
    %v572 = vunpack.c.h.b16 %v350
    %v573 = vunpack.c.l.b16 %v351
    %v574 = vunpack.c.h.b16 %v351
    %v575 = vunpack.c.l.b16 %v352
    %v576 = vunpack.c.l.b16 %v353
    %v577 = vunpack.c.h.b16 %v353
    %v578 = vunpack.c.l.b16 %v354
    %v579 = vunpack.c.h.b16 %v354
    %v580 = vunpack.c.l.b16 %v355
    %v581 = vunpack.c.l.b16 %v356
    %v582 = vunpack.c.h.b16 %v356
    %v583 = vunpack.c.l.b16 %v357
    %v584 = vunpack.c.h.b16 %v357
    %v585 = vunpack.c.l.b16 %v358
    %v586 = vunpack.c.l.b16 %v359
    %v587 = vunpack.c.h.b16 %v359
    %v588 = vunpack.c.l.b16 %v360
    %v589 = vunpack.c.h.b16 %v360
    %v590 = vunpack.c.l.b16 %v361
    %v591 = vunpack.c.l.b16 %v362
    %v592 = vunpack.c.h.b16 %v362
    %v593 = vunpack.c.l.b16 %v363
    %v594 = vunpack.c.h.b16 %v363
    %v595 = vunpack.c.l.b16 %v364
    %v596 = vunpack.c.l.b16 %v365
    %v597 = vunpack.c.h.b16 %v365
    %v598 = vunpack.c.l.b16 %v366
    %v599 = vunpack.c.h.b16 %v366
    %v600 = vunpack.c.l.b16 %v367
    %v601 = vunpack.c.l.b16 %v368
    %v602 = vunpack.c.h.b16 %v368
    %v603 = vunpack.c.l.b16 %v369
    %v604 = vunpack.c.h.b16 %v369
    %v605 = vunpack.c.l.b16 %v370
    %v606 = vunpack.c.l.b16 %v371
    %v607 = vunpack.c.h.b16 %v371
    %v608 = vunpack.c.l.b16 %v372
    %v609 = vunpack.c.h.b16 %v372
    %v610 = vunpack.c.l.b16 %v373
    %v611 = vunpack.c.l.b16 %v374
    %v612 = vunpack.c.h.b16 %v374
    %v613 = vunpack.c.l.b16 %v375
    %v614 = vunpack.c.h.b16 %v375
    %v615 = vunpack.c.l.b16 %v376
    %v616 = vunpack.c.l.b16 %v377
    %v617 = vunpack.c.h.b16 %v377
    %v618 = vunpack.c.l.b16 %v378
    %v619 = vunpack.c.h.b16 %v378
    %v620 = vunpack.c.l.b16 %v379
    %v621 = vunpack.c.l.b16 %v380
    %v622 = vunpack.c.h.b16 %v380
    %v623 = vunpack.c.l.b16 %v381
    %v624 = vunpack.c.h.b16 %v381
    %v625 = vunpack.c.l.b16 %v382
    %v626 = vunpack.c.l.b16 %v383
    %v627 = vunpack.c.h.b16 %v383
    %v628 = vunpack.c.l.b16 %v384
    %v629 = vunpack.c.h.b16 %v384
    %v630 = vunpack.c.l.b16 %v385
    %v631 = vunpack.c.l.b16 %v386
    %v632 = vunpack.c.h.b16 %v386
    %v633 = vunpack.c.l.b16 %v387
    %v634 = vunpack.c.h.b16 %v387
    %v635 = vunpack.c.l.b16 %v388
    %v636 = vunpack.c.l.b16 %v389
    %v637 = vunpack.c.h.b16 %v389
    %v638 = vunpack.c.l.b16 %v390
    %v639 = vunpack.c.h.b16 %v390
    %v640 = vunpack.c.l.b16 %v391
    %v641 = vunpack.c.l.b16 %v392
    %v642 = vunpack.c.h.b16 %v392
    %v643 = vunpack.c.l.b16 %v393
    %v644 = vunpack.c.h.b16 %v393
    %v645 = vunpack.c.l.b16 %v394
    %v646 = vunpack.c.l.b16 %v395
    %v647 = vunpack.c.h.b16 %v395
    %v648 = vunpack.c.l.b16 %v396
    %v649 = vunpack.c.h.b16 %v396
    %v650 = vunpack.c.l.b16 %v397
    %v651 = vunpack.c.l.b16 %v398
    %v652 = vunpack.c.h.b16 %v398
    %v653 = vunpack.c.l.b16 %v399
    %v654 = vunpack.c.h.b16 %v399
    %v655 = vunpack.c.l.b16 %v400
    %v656 = vunpack.c.l.b16 %v401
    %v657 = vunpack.c.h.b16 %v401
    %v658 = vunpack.c.l.b16 %v402
    %v659 = vunpack.c.h.b16 %v402
    %v660 = vunpack.c.l.b16 %v403
    %v661 = vunpack.c.l.b16 %v404
    %v662 = vunpack.c.h.b16 %v404
    %v663 = vunpack.c.l.b16 %v405
    %v664 = vunpack.c.h.b16 %v405
    %v665 = vunpack.c.l.b16 %v406
    %v666 = vunpack.c.l.b16 %v407
    %v667 = vunpack.c.h.b16 %v407
    %v668 = vunpack.c.l.b16 %v408
    %v669 = vunpack.c.h.b16 %v408
    %v670 = vunpack.c.l.b16 %v409
    %v671 = vunpack.c.l.b16 %v410
    %v672 = vunpack.c.h.b16 %v410
    %v673 = vunpack.c.l.b16 %v411
    %v674 = vunpack.c.h.b16 %v411
    %v675 = vunpack.c.l.b16 %v412
    %v676 = vunpack.c.l.b16 %v413
    %v677 = vunpack.c.h.b16 %v413
    %v678 = vunpack.c.l.b16 %v414
    %v679 = vunpack.c.h.b16 %v414
    %v680 = vunpack.c.l.b16 %v415
    %v681 = vunpack.c.l.b16 %v416
    %v682 = vunpack.c.h.b16 %v416
    %v683 = vunpack.c.l.b16 %v417
    %v684 = vunpack.c.h.b16 %v417
    %v685 = vunpack.c.l.b16 %v418
    %v686 = vunpack.c.l.b16 %v419
    %v687 = vunpack.c.h.b16 %v419
    %v688 = vunpack.c.l.b16 %v420
    %v689 = vunpack.c.h.b16 %v420
    %v690 = vunpack.c.l.b16 %v421
    %v691 = vunpack.c.l.b16 %v422
    %v692 = vunpack.c.h.b16 %v422
    %v693 = vunpack.c.l.b16 %v423
    %v694 = vunpack.c.h.b16 %v423
    %v695 = vunpack.c.l.b16 %v424
    %v696 = vunpack.c.l.b16 %v425
    %v697 = vunpack.c.h.b16 %v425
    %v698 = vunpack.c.l.b16 %v426
    %v699 = vunpack.c.h.b16 %v426
    %v700 = vunpack.c.l.b16 %v427
    %v701 = vunpack.c.l.b16 %v428
    %v702 = vunpack.c.h.b16 %v428
    %v703 = vunpack.c.l.b16 %v429
    %v704 = vunpack.c.h.b16 %v429
    %v705 = vunpack.c.l.b16 %v430
    %v706 = vunpack.c.l.b16 %v431
    %v707 = vunpack.c.h.b16 %v431
    %v708 = vunpack.c.l.b16 %v432
    %v709 = vunpack.c.h.b16 %v432
    %v710 = vunpack.c.l.b16 %v433
    %v711 = vunpack.c.l.b16 %v434
    %v712 = vunpack.c.h.b16 %v434
    %v713 = vunpack.c.l.b16 %v435
    %v714 = vunpack.c.h.b16 %v435
    %v715 = vunpack.c.l.b16 %v436
    %v716 = vunpack.c.l.b16 %v437
    %v717 = vunpack.c.h.b16 %v437
    %v718 = vunpack.c.l.b16 %v438
    %v719 = vunpack.c.h.b16 %v438
    %v720 = vunpack.c.l.b16 %v439
    %v721 = vunpack.c.l.b16 %v440
    %v722 = vunpack.c.h.b16 %v440
    %v723 = vunpack.c.l.b16 %v441
    %v724 = vunpack.c.h.b16 %v441
    %v725 = vunpack.c.l.b16 %v442
    %v726 = vpack.c.b16 %v571, %v566
    %v727 = vpack.c.b16 %v572, %v567
    %v728 = vpack.c.b16 %v573, %v568
    %v729 = vpack.c.b16 %v574, %v569
    %v730 = vpack.c.b16 %v575, %v570
    %v731 = vpack.c.b16 %v581, %v576
    %v732 = vpack.c.b16 %v582, %v577
    %v733 = vpack.c.b16 %v583, %v578
    %v734 = vpack.c.b16 %v584, %v579
    %v735 = vpack.c.b16 %v585, %v580
    %v736 = vpack.c.b16 %v591, %v586
    %v737 = vpack.c.b16 %v592, %v587
    %v738 = vpack.c.b16 %v593, %v588
    %v739 = vpack.c.b16 %v594, %v589
    %v740 = vpack.c.b16 %v595, %v590
    %v741 = vpack.c.b16 %v601, %v596
    %v742 = vpack.c.b16 %v602, %v597
    %v743 = vpack.c.b16 %v603, %v598
    %v744 = vpack.c.b16 %v604, %v599
    %v745 = vpack.c.b16 %v605, %v600
    %v746 = vpack.c.b16 %v611, %v606
    %v747 = vpack.c.b16 %v612, %v607
    %v748 = vpack.c.b16 %v613, %v608
    %v749 = vpack.c.b16 %v614, %v609
    %v750 = vpack.c.b16 %v615, %v610
    %v751 = vpack.c.b16 %v621, %v616
    %v752 = vpack.c.b16 %v622, %v617
    %v753 = vpack.c.b16 %v623, %v618
    %v754 = vpack.c.b16 %v624, %v619
    %v755 = vpack.c.b16 %v625, %v620
    %v756 = vpack.c.b16 %v631, %v626
    %v757 = vpack.c.b16 %v632, %v627
    %v758 = vpack.c.b16 %v633, %v628
    %v759 = vpack.c.b16 %v634, %v629
    %v760 = vpack.c.b16 %v635, %v630
    %v761 = vpack.c.b16 %v641, %v636
    %v762 = vpack.c.b16 %v642, %v637
    %v763 = vpack.c.b16 %v643, %v638
    %v764 = vpack.c.b16 %v644, %v639
    %v765 = vpack.c.b16 %v645, %v640
    %v766 = vpack.c.b16 %v651, %v646
    %v767 = vpack.c.b16 %v652, %v647
    %v768 = vpack.c.b16 %v653, %v648
    %v769 = vpack.c.b16 %v654, %v649
    %v770 = vpack.c.b16 %v655, %v650
    %v771 = vpack.c.b16 %v661, %v656
    %v772 = vpack.c.b16 %v662, %v657
    %v773 = vpack.c.b16 %v663, %v658
    %v774 = vpack.c.b16 %v664, %v659
    %v775 = vpack.c.b16 %v665, %v660
    %v776 = vpack.c.b16 %v671, %v666
    %v777 = vpack.c.b16 %v672, %v667
    %v778 = vpack.c.b16 %v673, %v668
    %v779 = vpack.c.b16 %v674, %v669
    %v780 = vpack.c.b16 %v675, %v670
    %v781 = vpack.c.b16 %v681, %v676
    %v782 = vpack.c.b16 %v682, %v677
    %v783 = vpack.c.b16 %v683, %v678
    %v784 = vpack.c.b16 %v684, %v679
    %v785 = vpack.c.b16 %v685, %v680
    %v786 = vpack.c.b16 %v691, %v686
    %v787 = vpack.c.b16 %v692, %v687
    %v788 = vpack.c.b16 %v693, %v688
    %v789 = vpack.c.b16 %v694, %v689
    %v790 = vpack.c.b16 %v695, %v690
    %v791 = vpack.c.b16 %v701, %v696
    %v792 = vpack.c.b16 %v702, %v697
    %v793 = vpack.c.b16 %v703, %v698
    %v794 = vpack.c.b16 %v704, %v699
    %v795 = vpack.c.b16 %v705, %v700
    %v796 = vpack.c.b16 %v711, %v706
    %v797 = vpack.c.b16 %v712, %v707
    %v798 = vpack.c.b16 %v713, %v708
    %v799 = vpack.c.b16 %v714, %v709
    %v800 = vpack.c.b16 %v715, %v710
    %v801 = vpack.c.b16 %v721, %v716
    %v802 = vpack.c.b16 %v722, %v717
    %v803 = vpack.c.b16 %v723, %v718
    %v804 = vpack.c.b16 %v724, %v719
    %v805 = vpack.c.b16 %v725, %v720
    %886 = vmatprep.subr.bf16.mxu0 %v762
    %887 = vmatpush1.bf16.msra.mxu0 %v761
    %888 = vmatprep.subr.bf16.mxu0 %v757
    %889 = vmatpush1.bf16.msra.mxu0 %v756
    %890 = vmatprep.subr.bf16.mxu0 %v752
    %891 = vmatpush1.bf16.msra.mxu0 %v751
    %892 = vmatprep.subr.bf16.mxu0 %v747
    %893 = vmatpush1.bf16.msra.mxu0 %v746
    %894 = vmatprep.subr.bf16.mxu0 %v742
    %895 = vmatpush1.bf16.msra.mxu0 %v741
    %896 = vmatprep.subr.bf16.mxu0 %v737
    %897 = vmatpush1.bf16.msra.mxu0 %v736
    %898 = vmatprep.subr.bf16.mxu0 %v732
    %899 = vmatpush1.bf16.msra.mxu0 %v731
    %900 = vmatprep.subr.bf16.mxu0 %v727
    %901 = vmatpush1.bf16.msra.mxu0 %v726
    %902 = vmatprep.subr.bf16.mxu0 %v802
    %903 = vmatpush2.bf16.msra.mxu0 %v801
    %904 = vmatprep.subr.bf16.mxu0 %v797
    %905 = vmatpush2.bf16.msra.mxu0 %v796
    %906 = vmatprep.subr.bf16.mxu0 %v792
    %907 = vmatpush2.bf16.msra.mxu0 %v791
    %908 = vmatprep.subr.bf16.mxu0 %v787
    %909 = vmatpush2.bf16.msra.mxu0 %v786
    %910 = vmatprep.subr.bf16.mxu0 %v782
    %911 = vmatpush2.bf16.msra.mxu0 %v781
    %912 = vmatprep.subr.bf16.mxu0 %v777
    %913 = vmatpush2.bf16.msra.mxu0 %v776
    %914 = vmatprep.subr.bf16.mxu0 %v772
    %915 = vmatpush2.bf16.msra.mxu0 %v771
    %916 = vmatprep.subr.bf16.mxu0 %v767
    %917 = vmatpush2.bf16.msra.mxu0 %v766
    %918 = vmatprep.mubr.bf16.mxu0 %v346
    %919 = vmatmul.mubr.bf16.gmra.mxu0 %v345
    %v920 = vpop.f32.mrf.mxu0
    %v921 = vadd.f32 %v448, %v920
    %v922 = vpop.f32.mrf.mxu0
    %v923 = vadd.f32 %v452, %v922
    %v924 = vpop.f32.mrf.mxu0
    %v925 = vpop.f32.mrf.mxu0
    %926 = vdwg.mxu0
    %927 = vmatprep.subr.bf16.mxu0 %v764
    %928 = vmatpush1.bf16.msra.mxu0 %v763
    %929 = vmatprep.subr.bf16.mxu0 %v759
    %930 = vmatpush1.bf16.msra.mxu0 %v758
    %931 = vmatprep.subr.bf16.mxu0 %v754
    %932 = vmatpush1.bf16.msra.mxu0 %v753
    %933 = vmatprep.subr.bf16.mxu0 %v749
    %934 = vmatpush1.bf16.msra.mxu0 %v748
    %935 = vmatprep.subr.bf16.mxu0 %v744
    %936 = vmatpush1.bf16.msra.mxu0 %v743
    %937 = vmatprep.subr.bf16.mxu0 %v739
    %938 = vmatpush1.bf16.msra.mxu0 %v738
    %939 = vmatprep.subr.bf16.mxu0 %v734
    %940 = vmatpush1.bf16.msra.mxu0 %v733
    %941 = vmatprep.subr.bf16.mxu0 %v729
    %942 = vmatpush1.bf16.msra.mxu0 %v728
    %943 = vmatprep.subr.bf16.mxu0 %v804
    %944 = vmatpush2.bf16.msra.mxu0 %v803
    %945 = vmatprep.subr.bf16.mxu0 %v799
    %946 = vmatpush2.bf16.msra.mxu0 %v798
    %947 = vmatprep.subr.bf16.mxu0 %v794
    %948 = vmatpush2.bf16.msra.mxu0 %v793
    %949 = vmatprep.subr.bf16.mxu0 %v789
    %950 = vmatpush2.bf16.msra.mxu0 %v788
    %951 = vmatprep.subr.bf16.mxu0 %v784
    %952 = vmatpush2.bf16.msra.mxu0 %v783
    %953 = vmatprep.subr.bf16.mxu0 %v779
    %954 = vmatpush2.bf16.msra.mxu0 %v778
    %955 = vmatprep.subr.bf16.mxu0 %v774
    %956 = vmatpush2.bf16.msra.mxu0 %v773
    %957 = vmatprep.subr.bf16.mxu0 %v769
    %958 = vmatpush2.bf16.msra.mxu0 %v768
    %959 = vmatprep.mubr.bf16.mxu0 %v346
    %960 = vmatmul.mubr.bf16.gmra.mxu0 %v345
    %v961 = vpop.f32.mrf.mxu0
    %v962 = vadd.f32 %v456, %v961
    %v963 = vpop.f32.mrf.mxu0
    %v964 = vadd.f32 %v460, %v963
    %v965 = vpop.f32.mrf.mxu0
    %v966 = vpop.f32.mrf.mxu0
    %967 = vdwg.mxu0
    %968 = vmatprep.subr.bf16.mxu0 0
    %969 = vmatpush1.bf16.msra.mxu0 %v765
    %970 = vmatprep.subr.bf16.mxu0 0
    %971 = vmatpush1.bf16.msra.mxu0 %v760
    %972 = vmatprep.subr.bf16.mxu0 0
    %973 = vmatpush1.bf16.msra.mxu0 %v755
    %974 = vmatprep.subr.bf16.mxu0 0
    %975 = vmatpush1.bf16.msra.mxu0 %v750
    %976 = vmatprep.subr.bf16.mxu0 0
    %977 = vmatpush1.bf16.msra.mxu0 %v745
    %978 = vmatprep.subr.bf16.mxu0 0
    %979 = vmatpush1.bf16.msra.mxu0 %v740
    %980 = vmatprep.subr.bf16.mxu0 0
    %981 = vmatpush1.bf16.msra.mxu0 %v735
    %982 = vmatprep.subr.bf16.mxu0 0
    %983 = vmatpush1.bf16.msra.mxu0 %v730
    %984 = vmatprep.subr.bf16.mxu0 0
    %985 = vmatpush2.bf16.msra.mxu0 %v805
    %986 = vmatprep.subr.bf16.mxu0 0
    %987 = vmatpush2.bf16.msra.mxu0 %v800
    %988 = vmatprep.subr.bf16.mxu0 0
    %989 = vmatpush2.bf16.msra.mxu0 %v795
    %990 = vmatprep.subr.bf16.mxu0 0
    %991 = vmatpush2.bf16.msra.mxu0 %v790
    %992 = vmatprep.subr.bf16.mxu0 0
    %993 = vmatpush2.bf16.msra.mxu0 %v785
    %994 = vmatprep.subr.bf16.mxu0 0
    %995 = vmatpush2.bf16.msra.mxu0 %v780
    %996 = vmatprep.subr.bf16.mxu0 0
    %997 = vmatpush2.bf16.msra.mxu0 %v775
    %998 = vmatprep.subr.bf16.mxu0 0
    %999 = vmatpush2.bf16.msra.mxu0 %v770
    %1000 = vmatprep.mubr.bf16.mxu0 %v346
    %1001 = vmatmul.mubr.bf16.gmra.mxu0 %v345
    %v1002 = vpop.f32.mrf.mxu0
    %v1003 = vadd.f32 %v464, %v1002
    %v1004 = vpop.f32.mrf.mxu0
    %v1005 = vpop.f32.mrf.mxu0
    %v1006 = vpop.f32.mrf.mxu0
    %1007 = vdwg.mxu0
    %v1008 = vmul.f32 %v921, 0.5
    %v1009 = vmul.f32 %v923, 0.5
    %v1010 = vmul.f32 %v962, 0.5
    %v1011 = vmul.f32 %v964, 0.5
    %v1012 = vmul.f32 %v1003, 0.5
    %v1013 = vtanh.pop %v1008
    %v1014 = vtanh.pop %v1009
    %v1015 = vtanh.pop %v1010
    %v1016 = vtanh.pop %v1011
    %v1017 = vtanh.pop %v1012
    %v1018 = vadd.f32 %v1013, 1.0
    %v1019 = vadd.f32 %v1014, 1.0
    %v1020 = vadd.f32 %v1015, 1.0
    %v1021 = vadd.f32 %v1016, 1.0
    %v1022 = vadd.f32 %v1017, 1.0
    %v1023 = vmul.f32 %v1018, 0.5
    %v1024 = vmul.f32 %v1019, 0.5
    %v1025 = vmul.f32 %v1020, 0.5
    %v1026 = vmul.f32 %v1021, 0.5
    %v1027 = vmul.f32 %v1022, 0.5
    %v1028 = vpack.c.bf16 %v1023, %v1023
    %v1029 = vpack.c.bf16 %v1024, %v1024
    %v1030 = vpack.c.bf16 %v1025, %v1025
    %v1031 = vpack.c.bf16 %v1026, %v1026
    %v1032 = vpack.c.bf16 %v1027, %v1027
    %v1033 = vld [vmem:[#allocation12] sm:$0xf]
    %v1034 = vld [vmem:[#allocation12 + $0x4] sm:$0xf]
    %v1035 = vld [vmem:[#allocation12 + $0x8] sm:$0xf]
    %v1036 = vld [vmem:[#allocation12 + $0xc] sm:$0xf]
    %v1037 = vld [vmem:[#allocation12 + $0x10] sm:$0xf]
    %v1038 = vld [vmem:[#allocation12 + $0x14] sm:$0xf]
    %v1039 = vld [vmem:[#allocation12 + $0x18] sm:$0xf]
    %v1040 = vld [vmem:[#allocation12 + $0x1c] sm:$0xf]
    %v1041 = vld [vmem:[#allocation12 + $0x20] sm:$0xf]
    %v1042 = vld [vmem:[#allocation12 + $0x24] sm:$0xf]
    %v1043 = vld [vmem:[#allocation12 + $0x28] sm:$0xf]
    %v1044 = vld [vmem:[#allocation12 + $0x2c] sm:$0xf]
    %v1045 = vld [vmem:[#allocation12 + $0x30] sm:$0xf]
    %v1046 = vld [vmem:[#allocation12 + $0x34] sm:$0xf]
    %v1047 = vld [vmem:[#allocation12 + $0x38] sm:$0xf]
    %v1048 = vld [vmem:[#allocation12 + $0x3c] sm:$0xf]
    %v1049 = vld [vmem:[#allocation12 + $0x40] sm:$0xf]
    %v1050 = vld [vmem:[#allocation12 + $0x44] sm:$0xf]
    %v1051 = vld [vmem:[#allocation12 + $0x48] sm:$0xf]
    %v1052 = vld [vmem:[#allocation12 + $0x4c] sm:$0xf]
    %v1053 = vld [vmem:[#allocation12 + $0x50] sm:$0xf]
    %v1054 = vld [vmem:[#allocation12 + $0x54] sm:$0xf]
    %v1055 = vld [vmem:[#allocation12 + $0x58] sm:$0xf]
    %v1056 = vld [vmem:[#allocation12 + $0x5c] sm:$0xf]
    %v1057 = vld [vmem:[#allocation12 + $0x60] sm:$0xf]
    %v1058 = vld [vmem:[#allocation12 + $0x64] sm:$0xf]
    %v1059 = vld [vmem:[#allocation12 + $0x68] sm:$0xf]
    %v1060 = vld [vmem:[#allocation12 + $0x6c] sm:$0xf]
    %v1061 = vld [vmem:[#allocation12 + $0x70] sm:$0xf]
    %v1062 = vld [vmem:[#allocation12 + $0x74] sm:$0xf]
    %v1063 = vld [vmem:[#allocation12 + $0x78] sm:$0xf]
    %v1064 = vld [vmem:[#allocation12 + $0x7c] sm:$0xf]
    %v1065 = vld [vmem:[#allocation12 + $0x80] sm:$0xf]
    %v1066 = vld [vmem:[#allocation12 + $0x84] sm:$0xf]
    %v1067 = vld [vmem:[#allocation12 + $0x88] sm:$0xf]
    %v1068 = vld [vmem:[#allocation12 + $0x8c] sm:$0xf]
    %v1069 = vld [vmem:[#allocation12 + $0x90] sm:$0xf]
    %v1070 = vld [vmem:[#allocation12 + $0x94] sm:$0xf]
    %v1071 = vld [vmem:[#allocation12 + $0x98] sm:$0xf]
    %v1072 = vld [vmem:[#allocation12 + $0x9c] sm:$0xf]
    %v1073 = vld [vmem:[#allocation12 + $0xa0] sm:$0xf]
    %v1074 = vld [vmem:[#allocation12 + $0xa4] sm:$0xf]
    %v1075 = vld [vmem:[#allocation12 + $0xa8] sm:$0xf]
    %v1076 = vld [vmem:[#allocation12 + $0xac] sm:$0xf]
    %v1077 = vld [vmem:[#allocation12 + $0xb0] sm:$0xf]
    %v1078 = vld [vmem:[#allocation12 + $0xb4] sm:$0xf]
    %v1079 = vld [vmem:[#allocation12 + $0xb8] sm:$0xf]
    %v1080 = vld [vmem:[#allocation12 + $0xbc] sm:$0xf]
    %v1081 = vld [vmem:[#allocation12 + $0xc0] sm:$0xf]
    %v1082 = vld [vmem:[#allocation12 + $0xc4] sm:$0xf]
    %v1083 = vld [vmem:[#allocation12 + $0xc8] sm:$0xf]
    %v1084 = vld [vmem:[#allocation12 + $0xcc] sm:$0xf]
    %v1085 = vld [vmem:[#allocation12 + $0xd0] sm:$0xf]
    %v1086 = vld [vmem:[#allocation12 + $0xd4] sm:$0xf]
    %v1087 = vld [vmem:[#allocation12 + $0xd8] sm:$0xf]
    %v1088 = vld [vmem:[#allocation12 + $0xdc] sm:$0xf]
    %v1089 = vld [vmem:[#allocation12 + $0xe0] sm:$0xf]
    %v1090 = vld [vmem:[#allocation12 + $0xe4] sm:$0xf]
    %v1091 = vld [vmem:[#allocation12 + $0xe8] sm:$0xf]
    %v1092 = vld [vmem:[#allocation12 + $0xec] sm:$0xf]
    %v1093 = vld [vmem:[#allocation12 + $0xf0] sm:$0xf]
    %v1094 = vld [vmem:[#allocation12 + $0xf4] sm:$0xf]
    %v1095 = vld [vmem:[#allocation12 + $0xf8] sm:$0xf]
    %v1096 = vld [vmem:[#allocation12 + $0xfc] sm:$0xf]
    %v1097 = vld [vmem:[#allocation12 + $0x100] sm:$0xf]
    %v1098 = vld [vmem:[#allocation12 + $0x104] sm:$0xf]
    %v1099 = vld [vmem:[#allocation12 + $0x108] sm:$0xf]
    %v1100 = vld [vmem:[#allocation12 + $0x10c] sm:$0xf]
    %v1101 = vld [vmem:[#allocation12 + $0x110] sm:$0xf]
    %v1102 = vld [vmem:[#allocation12 + $0x114] sm:$0xf]
    %v1103 = vld [vmem:[#allocation12 + $0x118] sm:$0xf]
    %v1104 = vld [vmem:[#allocation12 + $0x11c] sm:$0xf]
    %v1105 = vld [vmem:[#allocation12 + $0x120] sm:$0xf]
    %v1106 = vld [vmem:[#allocation12 + $0x124] sm:$0xf]
    %v1107 = vld [vmem:[#allocation12 + $0x128] sm:$0xf]
    %v1108 = vld [vmem:[#allocation12 + $0x12c] sm:$0xf]
    %v1109 = vld [vmem:[#allocation12 + $0x130] sm:$0xf]
    %v1110 = vld [vmem:[#allocation12 + $0x134] sm:$0xf]
    %v1111 = vld [vmem:[#allocation12 + $0x138] sm:$0xf]
    %v1112 = vld [vmem:[#allocation12 + $0x13c] sm:$0xf]
    %v1113 = vld [vmem:[%s8] sm:$0x1]
    %v1115 = vlaneseq
    %v1116 = vshrl.u32 %v1115, 7
    %v1117 = vsub.s32 0, %v1116
    %v1118 = vrot.slane %v1113, %v1117
    %v1200 = vunpack.c.l.b16 %v1033
    %v1201 = vunpack.c.l.b16 %v1034
    %v1202 = vunpack.c.l.b16 %v1035
    %v1203 = vunpack.c.l.b16 %v1036
    %v1204 = vunpack.c.l.b16 %v1037
    %v1205 = vunpack.c.l.b16 %v1038
    %v1206 = vunpack.c.l.b16 %v1039
    %v1207 = vunpack.c.l.b16 %v1040
    %v1208 = vunpack.c.l.b16 %v1041
    %v1209 = vunpack.c.l.b16 %v1042
    %v1210 = vunpack.c.l.b16 %v1043
    %v1211 = vunpack.c.l.b16 %v1044
    %v1212 = vunpack.c.l.b16 %v1045
    %v1213 = vunpack.c.l.b16 %v1046
    %v1214 = vunpack.c.l.b16 %v1047
    %v1215 = vunpack.c.l.b16 %v1048
    %v1216 = vunpack.c.l.b16 %v1049
    %v1217 = vunpack.c.l.b16 %v1050
    %v1218 = vunpack.c.l.b16 %v1051
    %v1219 = vunpack.c.l.b16 %v1052
    %v1220 = vunpack.c.l.b16 %v1053
    %v1221 = vunpack.c.l.b16 %v1054
    %v1222 = vunpack.c.l.b16 %v1055
    %v1223 = vunpack.c.l.b16 %v1056
    %v1224 = vunpack.c.l.b16 %v1057
    %v1225 = vunpack.c.l.b16 %v1058
    %v1226 = vunpack.c.l.b16 %v1059
    %v1227 = vunpack.c.l.b16 %v1060
    %v1228 = vunpack.c.l.b16 %v1061
    %v1229 = vunpack.c.l.b16 %v1062
    %v1230 = vunpack.c.l.b16 %v1063
    %v1231 = vunpack.c.l.b16 %v1064
    %v1232 = vunpack.c.l.b16 %v1065
    %v1233 = vunpack.c.l.b16 %v1066
    %v1234 = vunpack.c.l.b16 %v1067
    %v1235 = vunpack.c.l.b16 %v1068
    %v1236 = vunpack.c.l.b16 %v1069
    %v1237 = vunpack.c.l.b16 %v1070
    %v1238 = vunpack.c.l.b16 %v1071
    %v1239 = vunpack.c.l.b16 %v1072
    %v1240 = vunpack.c.l.b16 %v1073
    %v1241 = vunpack.c.l.b16 %v1074
    %v1242 = vunpack.c.l.b16 %v1075
    %v1243 = vunpack.c.l.b16 %v1076
    %v1244 = vunpack.c.l.b16 %v1077
    %v1245 = vunpack.c.l.b16 %v1078
    %v1246 = vunpack.c.l.b16 %v1079
    %v1247 = vunpack.c.l.b16 %v1080
    %v1248 = vunpack.c.l.b16 %v1081
    %v1249 = vunpack.c.l.b16 %v1082
    %v1250 = vunpack.c.l.b16 %v1083
    %v1251 = vunpack.c.l.b16 %v1084
    %v1252 = vunpack.c.l.b16 %v1085
    %v1253 = vunpack.c.l.b16 %v1086
    %v1254 = vunpack.c.l.b16 %v1087
    %v1255 = vunpack.c.l.b16 %v1088
    %v1256 = vunpack.c.l.b16 %v1089
    %v1257 = vunpack.c.l.b16 %v1090
    %v1258 = vunpack.c.l.b16 %v1091
    %v1259 = vunpack.c.l.b16 %v1092
    %v1260 = vunpack.c.l.b16 %v1093
    %v1261 = vunpack.c.l.b16 %v1094
    %v1262 = vunpack.c.l.b16 %v1095
    %v1263 = vunpack.c.l.b16 %v1096
    %v1264 = vunpack.c.l.b16 %v1097
    %v1265 = vunpack.c.l.b16 %v1098
    %v1266 = vunpack.c.l.b16 %v1099
    %v1267 = vunpack.c.l.b16 %v1100
    %v1268 = vunpack.c.l.b16 %v1101
    %v1269 = vunpack.c.l.b16 %v1102
    %v1270 = vunpack.c.l.b16 %v1103
    %v1271 = vunpack.c.l.b16 %v1104
    %v1272 = vunpack.c.l.b16 %v1105
    %v1273 = vunpack.c.l.b16 %v1106
    %v1274 = vunpack.c.l.b16 %v1107
    %v1275 = vunpack.c.l.b16 %v1108
    %v1276 = vunpack.c.l.b16 %v1109
    %v1277 = vunpack.c.l.b16 %v1110
    %v1278 = vunpack.c.l.b16 %v1111
    %v1279 = vunpack.c.l.b16 %v1112
    %v1280 = vpack.c.b16 %v1201, %v1200
    %v1281 = vpack.c.b16 %v1203, %v1202
    %v1282 = vpack.c.b16 %v1205, %v1204
    %v1283 = vpack.c.b16 %v1207, %v1206
    %v1284 = vpack.c.b16 %v1209, %v1208
    %v1285 = vpack.c.b16 %v1211, %v1210
    %v1286 = vpack.c.b16 %v1213, %v1212
    %v1287 = vpack.c.b16 %v1215, %v1214
    %v1288 = vpack.c.b16 %v1217, %v1216
    %v1289 = vpack.c.b16 %v1219, %v1218
    %v1290 = vpack.c.b16 %v1221, %v1220
    %v1291 = vpack.c.b16 %v1223, %v1222
    %v1292 = vpack.c.b16 %v1225, %v1224
    %v1293 = vpack.c.b16 %v1227, %v1226
    %v1294 = vpack.c.b16 %v1229, %v1228
    %v1295 = vpack.c.b16 %v1231, %v1230
    %v1296 = vpack.c.b16 %v1233, %v1232
    %v1297 = vpack.c.b16 %v1235, %v1234
    %v1298 = vpack.c.b16 %v1237, %v1236
    %v1299 = vpack.c.b16 %v1239, %v1238
    %v1300 = vpack.c.b16 %v1241, %v1240
    %v1301 = vpack.c.b16 %v1243, %v1242
    %v1302 = vpack.c.b16 %v1245, %v1244
    %v1303 = vpack.c.b16 %v1247, %v1246
    %v1304 = vpack.c.b16 %v1249, %v1248
    %v1305 = vpack.c.b16 %v1251, %v1250
    %v1306 = vpack.c.b16 %v1253, %v1252
    %v1307 = vpack.c.b16 %v1255, %v1254
    %v1308 = vpack.c.b16 %v1257, %v1256
    %v1309 = vpack.c.b16 %v1259, %v1258
    %v1310 = vpack.c.b16 %v1261, %v1260
    %v1311 = vpack.c.b16 %v1263, %v1262
    %v1312 = vpack.c.b16 %v1265, %v1264
    %v1313 = vpack.c.b16 %v1267, %v1266
    %v1314 = vpack.c.b16 %v1269, %v1268
    %v1315 = vpack.c.b16 %v1271, %v1270
    %v1316 = vpack.c.b16 %v1273, %v1272
    %v1317 = vpack.c.b16 %v1275, %v1274
    %v1318 = vpack.c.b16 %v1277, %v1276
    %v1319 = vpack.c.b16 %v1279, %v1278
    %1360 = vmatprep.subr.bf16.mxu0 0
    %1361 = vmatpush1.bf16.msra.mxu0 %v1287
    %1362 = vmatprep.subr.bf16.mxu0 0
    %1363 = vmatpush1.bf16.msra.mxu0 %v1286
    %1364 = vmatprep.subr.bf16.mxu0 0
    %1365 = vmatpush1.bf16.msra.mxu0 %v1285
    %1366 = vmatprep.subr.bf16.mxu0 0
    %1367 = vmatpush1.bf16.msra.mxu0 %v1284
    %1368 = vmatprep.subr.bf16.mxu0 0
    %1369 = vmatpush1.bf16.msra.mxu0 %v1283
    %1370 = vmatprep.subr.bf16.mxu0 0
    %1371 = vmatpush1.bf16.msra.mxu0 %v1282
    %1372 = vmatprep.subr.bf16.mxu0 0
    %1373 = vmatpush1.bf16.msra.mxu0 %v1281
    %1374 = vmatprep.subr.bf16.mxu0 0
    %1375 = vmatpush1.bf16.msra.mxu0 %v1280
    %1376 = vmatprep.subr.bf16.mxu0 0
    %1377 = vmatpush2.bf16.msra.mxu0 %v1295
    %1378 = vmatprep.subr.bf16.mxu0 0
    %1379 = vmatpush2.bf16.msra.mxu0 %v1294
    %1380 = vmatprep.subr.bf16.mxu0 0
    %1381 = vmatpush2.bf16.msra.mxu0 %v1293
    %1382 = vmatprep.subr.bf16.mxu0 0
    %1383 = vmatpush2.bf16.msra.mxu0 %v1292
    %1384 = vmatprep.subr.bf16.mxu0 0
    %1385 = vmatpush2.bf16.msra.mxu0 %v1291
    %1386 = vmatprep.subr.bf16.mxu0 0
    %1387 = vmatpush2.bf16.msra.mxu0 %v1290
    %1388 = vmatprep.subr.bf16.mxu0 0
    %1389 = vmatpush2.bf16.msra.mxu0 %v1289
    %1390 = vmatprep.subr.bf16.mxu0 0
    %1391 = vmatpush2.bf16.msra.mxu0 %v1288
    %1392 = vmatprep.mubr.bf16.mxu0 %v1029
    %1393 = vmatmul.mubr.bf16.gmra.mxu0 %v1028
    %v1394 = vpop.f32.mrf.mxu0
    %v1395 = vadd.f32 %v1118, %v1394
    %v1396 = vpop.f32.mrf.mxu0
    %v1397 = vpop.f32.mrf.mxu0
    %v1398 = vpop.f32.mrf.mxu0
    %1399 = vdwg.mxu0
    %1400 = vmatprep.subr.bf16.mxu0 0
    %1401 = vmatpush1.bf16.msra.mxu0 %v1303
    %1402 = vmatprep.subr.bf16.mxu0 0
    %1403 = vmatpush1.bf16.msra.mxu0 %v1302
    %1404 = vmatprep.subr.bf16.mxu0 0
    %1405 = vmatpush1.bf16.msra.mxu0 %v1301
    %1406 = vmatprep.subr.bf16.mxu0 0
    %1407 = vmatpush1.bf16.msra.mxu0 %v1300
    %1408 = vmatprep.subr.bf16.mxu0 0
    %1409 = vmatpush1.bf16.msra.mxu0 %v1299
    %1410 = vmatprep.subr.bf16.mxu0 0
    %1411 = vmatpush1.bf16.msra.mxu0 %v1298
    %1412 = vmatprep.subr.bf16.mxu0 0
    %1413 = vmatpush1.bf16.msra.mxu0 %v1297
    %1414 = vmatprep.subr.bf16.mxu0 0
    %1415 = vmatpush1.bf16.msra.mxu0 %v1296
    %1416 = vmatprep.subr.bf16.mxu0 0
    %1417 = vmatpush2.bf16.msra.mxu0 %v1311
    %1418 = vmatprep.subr.bf16.mxu0 0
    %1419 = vmatpush2.bf16.msra.mxu0 %v1310
    %1420 = vmatprep.subr.bf16.mxu0 0
    %1421 = vmatpush2.bf16.msra.mxu0 %v1309
    %1422 = vmatprep.subr.bf16.mxu0 0
    %1423 = vmatpush2.bf16.msra.mxu0 %v1308
    %1424 = vmatprep.subr.bf16.mxu0 0
    %1425 = vmatpush2.bf16.msra.mxu0 %v1307
    %1426 = vmatprep.subr.bf16.mxu0 0
    %1427 = vmatpush2.bf16.msra.mxu0 %v1306
    %1428 = vmatprep.subr.bf16.mxu0 0
    %1429 = vmatpush2.bf16.msra.mxu0 %v1305
    %1430 = vmatprep.subr.bf16.mxu0 0
    %1431 = vmatpush2.bf16.msra.mxu0 %v1304
    %1432 = vmatprep.mubr.bf16.mxu0 %v1031
    %1433 = vmatmul.mubr.bf16.gmra.mxu0 %v1030
    %v1434 = vpop.f32.mrf.mxu0
    %v1435 = vadd.f32 %v1395, %v1434
    %v1436 = vpop.f32.mrf.mxu0
    %v1437 = vpop.f32.mrf.mxu0
    %v1438 = vpop.f32.mrf.mxu0
    %1439 = vdwg.mxu0
    %1440 = vmatprep.subr.bf16.mxu0 0
    %1441 = vmatpush1.bf16.msra.mxu0 %v1319
    %1442 = vmatprep.subr.bf16.mxu0 0
    %1443 = vmatpush1.bf16.msra.mxu0 %v1318
    %1444 = vmatprep.subr.bf16.mxu0 0
    %1445 = vmatpush1.bf16.msra.mxu0 %v1317
    %1446 = vmatprep.subr.bf16.mxu0 0
    %1447 = vmatpush1.bf16.msra.mxu0 %v1316
    %1448 = vmatprep.subr.bf16.mxu0 0
    %1449 = vmatpush1.bf16.msra.mxu0 %v1315
    %1450 = vmatprep.subr.bf16.mxu0 0
    %1451 = vmatpush1.bf16.msra.mxu0 %v1314
    %1452 = vmatprep.subr.bf16.mxu0 0
    %1453 = vmatpush1.bf16.msra.mxu0 %v1313
    %1454 = vmatprep.subr.bf16.mxu0 0
    %1455 = vmatpush1.bf16.msra.mxu0 %v1312
    %1456 = vmatprep.subr.bf16.mxu0 0
    %1457 = vmatpush2.bf16.msra.mxu0 0
    %1458 = vmatprep.subr.bf16.mxu0 0
    %1459 = vmatpush2.bf16.msra.mxu0 0
    %1460 = vmatprep.subr.bf16.mxu0 0
    %1461 = vmatpush2.bf16.msra.mxu0 0
    %1462 = vmatprep.subr.bf16.mxu0 0
    %1463 = vmatpush2.bf16.msra.mxu0 0
    %1464 = vmatprep.subr.bf16.mxu0 0
    %1465 = vmatpush2.bf16.msra.mxu0 0
    %1466 = vmatprep.subr.bf16.mxu0 0
    %1467 = vmatpush2.bf16.msra.mxu0 0
    %1468 = vmatprep.subr.bf16.mxu0 0
    %1469 = vmatpush2.bf16.msra.mxu0 0
    %1470 = vmatprep.subr.bf16.mxu0 0
    %1471 = vmatpush2.bf16.msra.mxu0 0
    %1472 = vmatprep.mubr.bf16.mxu0 0
    %1473 = vmatmul.mubr.bf16.gmra.mxu0 %v1032
    %v1474 = vpop.f32.mrf.mxu0
    %v1475 = vadd.f32 %v1435, %v1474
    %v1476 = vpop.f32.mrf.mxu0
    %v1477 = vpop.f32.mrf.mxu0
    %v1478 = vpop.f32.mrf.mxu0
    %1479 = vdwg.mxu0
    %v1480 = vtanh.pop %v1475
    %v1481 = vld [vmem:[%s9] sm:$0x1]
    %v1482 = vpack.c.bf16 %v1480, %v1480
    %v1483 = vld [vmem:[#allocation2] sm:$0x1]
    %1485 = vset.pattern.permute.xlu0 0
    %1486 = vperm.xlu0 %1485, %v1483
    %v1487 = vpop.permute.xlu0 %1486
    %v1489 = vlaneseq
    %v1490 = vshrl.u32 %v1489, 7
    %v1491 = vsub.s32 0, %v1490
    %v1492 = vrot.slane %v1487, %v1491
    %1493 = vmatprep.subr.bf16.mxu0 0
    %1494 = vmatpush1.bf16.xpose.msra.mxu0 0
    %1495 = vmatprep.subr.bf16.mxu0 0
    %1496 = vmatpush1.bf16.xpose.msra.mxu0 0
    %1497 = vmatprep.subr.bf16.mxu0 0
    %1498 = vmatpush1.bf16.xpose.msra.mxu0 0
    %1499 = vmatprep.subr.bf16.mxu0 0
    %1500 = vmatpush1.bf16.xpose.msra.mxu0 0
    %1501 = vmatprep.subr.bf16.mxu0 0
    %1502 = vmatpush1.bf16.xpose.msra.mxu0 0
    %1503 = vmatprep.subr.bf16.mxu0 0
    %1504 = vmatpush1.bf16.xpose.msra.mxu0 0
    %1505 = vmatprep.subr.bf16.mxu0 0
    %1506 = vmatpush1.bf16.xpose.msra.mxu0 0
    %1507 = vmatprep.subr.bf16.mxu0 0
    %1508 = vmatpush1.bf16.xpose.msra.mxu0 %v1482
    %1509 = vmatprep.subr.bf16.mxu0 0
    %1510 = vmatpush2.bf16.xpose.msra.mxu0 0
    %1511 = vmatprep.subr.bf16.mxu0 0
    %1512 = vmatpush2.bf16.xpose.msra.mxu0 0
    %1513 = vmatprep.subr.bf16.mxu0 0
    %1514 = vmatpush2.bf16.xpose.msra.mxu0 0
    %1515 = vmatprep.subr.bf16.mxu0 0
    %1516 = vmatpush2.bf16.xpose.msra.mxu0 0
    %1517 = vmatprep.subr.bf16.mxu0 0
    %1518 = vmatpush2.bf16.xpose.msra.mxu0 0
    %1519 = vmatprep.subr.bf16.mxu0 0
    %1520 = vmatpush2.bf16.xpose.msra.mxu0 0
    %1521 = vmatprep.subr.bf16.mxu0 0
    %1522 = vmatpush2.bf16.xpose.msra.mxu0 0
    %1523 = vmatprep.subr.bf16.mxu0 0
    %1524 = vmatpush2.bf16.xpose.msra.mxu0 0
    %1525 = vmatprep.mubr.bf16.mxu0 0
    %1526 = vmatmul.mubr.bf16.gmra.mxu0 %v1481
    %v1527 = vpop.f32.mrf.mxu0
    %v1528 = vadd.f32 %v1492, %v1527
    %v1529 = vpop.f32.mrf.mxu0
    %v1530 = vpop.f32.mrf.mxu0
    %v1531 = vpop.f32.mrf.mxu0
    %1532 = vdwg.mxu0
    %vm1533 = vcmp.ge.f32.partialorder %v1528, 0.0
    %v1534 = vmul.f32 %v1528, 0.01
    %v1535 = vsel %vm1533, %v1528, %v1534
    %vm1536 = vcmask 57344
    %1537 = vst.msk [vmem:[#allocation14] sm:$0x1] %vm1536, %v1535
    // Predicated region
    $region70: #{net_forward.1} parent=1 // pred_check
      _
    $region71: #{net_forward.1} parent=1 // pred_check_branch
      %1539 = sbr.rel (0) target = $region73
    $region72: #{net_forward.1} parent=1 // pred_region
      %s1541 = ssub.s32 16, 16
      %1542 = vsyncadd [#allocation5], %s1541
      %s1544 = sshll.u32 [#allocation14], 4
      %s1545 = int_to_ptr.vmem [resolvable:$true] %s1544
      %1547 = dma.vmem_to_hbm [thread:$0]  %s1545, 16, %s11, [#allocation5]
    $region73: #{net_forward.1} parent=1 // pred_fallthru
      _
    // Predicated region
    $region74: #{net_forward.1} parent=1 // pred_check
      _
    $region75: #{net_forward.1} parent=1 // pred_check_branch
      %1549 = sbr.rel (0) target = $region77
    $region76: #{net_forward.1} parent=1 // pred_region
      %1550 = dma.done [#allocation5], 16
    $region77: #{net_forward.1} parent=1 // pred_fallthru
      _
    %1551 = vsyncpa [#allocation4], 1
    %1552 = vsyncpa [#allocation7], 1
    %1553 = vsyncpa [#allocation10], 1
    %1554 = vsyncpa [#allocation13], 1
    %1555 = vsyncpa [#allocation5], 1

</llo_original>
